<compile_context>
chip_gen: v7x
topology: tpu7x:2x2x1
jax: 0.10.0
libtpu: 0.0.40
codegen_flags: <defaults>
</compile_context>

<pallas_src>
import jax
import jax.numpy as jnp
from jax.experimental import pallas as pl
from jax.experimental.pallas import tpu as pltpu


# ----------------------------------------------------------------------------
# Fused kernel: B samples per grid step
# ----------------------------------------------------------------------------
def _make_se_block_kernel(B, H, W, Cin, planes, hidden, has_downsample):
    M = B * H                 # matmul M dimension (rows = (b, h))
    WCin = W * Cin            # input lane width
    WP = W * planes           # output lane width

    def kernel(*refs):
        if has_downsample:
            (x_ref, w1_ref, b1_ref, w2_ref, b2_ref, wd_ref, bd_ref,
             sw1t_ref, sb1_ref, sw2_ref, sb2_ref, o_ref) = refs
        else:
            (x_ref, w1_ref, b1_ref, w2_ref, b2_ref,
             sw1t_ref, sb1_ref, sw2_ref, sb2_ref, o_ref) = refs
            wd_ref = bd_ref = None

        # (B, H, W*Cin) -> (B*H, W*Cin); H is a full sublane group so this is layout-free.
        x = x_ref[...].reshape(M, WCin)                     # f32

        # Per-row "h within image" index for masking the H-direction shifts.
        ridx = jax.lax.broadcasted_iota(jnp.int32, (M, 1), 0)
        h_in_img = ridx % H
        not_top = h_in_img >= 1                             # row h-1 exists in this image
        not_bot = h_in_img < (H - 1)                        # row h+1 exists in this image

        def h_taps(a):
            """(M, L) f32 -> (M, 3L) bf16 patch matrix [a[h-1] | a[h] | a[h+1]] with
            per-image zero padding in H.  Lane offsets 0, L, 2L are 128-aligned."""
            L = a.shape[1]
            zero_row = jnp.zeros((1, L), a.dtype)
            up = jnp.concatenate([zero_row, a[:M - 1, :]], axis=0)   # a[h-1]
            dn = jnp.concatenate([a[1:, :], zero_row], axis=0)       # a[h+1]
            up = jnp.where(not_top, up, 0.0)
            dn = jnp.where(not_bot, dn, 0.0)
            return jnp.concatenate([up, a, dn], axis=1).astype(jnp.bfloat16)

        # ---- conv1 (3x3, pad 1, stride 1) + BN1 (scale folded into weights) + ReLU ----
        y1 = jnp.dot(h_taps(x), w1_ref[...], preferred_element_type=jnp.float32)
        y1 = jnp.maximum(y1 + b1_ref[...], 0.0)             # (M, W*planes) f32

        # ---- conv2 (3x3, pad 1, stride 1) + BN2 ----
        y2 = jnp.dot(h_taps(y1), w2_ref[...], preferred_element_type=jnp.float32)
        y2 = y2 + b2_ref[...]                               # (M, W*planes) f32

        # ---- SE: per-sample global average pool over (H, W) ----
        y2g = y2.reshape(B, H, WP)                          # layout-free split of rows
        col_sum = jnp.sum(y2g, axis=1)                      # (B, W*planes)
        pooled = col_sum[:, 0:planes]
        for w in range(1, W):
            pooled = pooled + col_sum[:, w * planes:(w + 1) * planes]
        pooled = pooled * (1.0 / (H * W))                   # (B, planes)

        # ---- SE FCs on the VPU (tiny; kept off the MXU) ----
        s_acc = sb2_ref[...]                                # (1, planes), broadcasts to (B, planes)
        for j in range(hidden):
            hj = jnp.sum(pooled * sw1t_ref[j:j + 1, :], axis=1, keepdims=True)
            hj = jnp.maximum(hj + sb1_ref[:, j:j + 1], 0.0)           # (B, 1)
            s_acc = s_acc + hj * sw2_ref[j:j + 1, :]                  # (B, planes)
        s = jax.nn.sigmoid(s_acc)                           # (B, planes)
        s_lane = jnp.concatenate([s] * W, axis=1)           # (B, W*planes)

        # ---- residual path (optional 1x1 conv + BN downsample, scale folded) ----
        if has_downsample:
            res = jnp.dot(x.astype(jnp.bfloat16), wd_ref[...],
                          preferred_element_type=jnp.float32) + bd_ref[...]
        else:
            res = x                                          # Cin == planes here

        out = jnp.maximum(y2g * s_lane[:, None, :] + res.reshape(B, H, WP), 0.0)
        o_ref[...] = out.astype(o_ref.dtype)                 # lane-dense (B, H, W*planes)

    return kernel


# ----------------------------------------------------------------------------
# Wrapper-side weight preparation (plain-JAX glue, f32 until the final bf16 cast)
# ----------------------------------------------------------------------------
def _banded_w_matrix(w_kw, W):
    """w_kw: (3, Cin, Cout) taps along kw for a fixed kh (already BN-scaled, f32).
    Returns (W*Cin, W*Cout) f32 whose (w_in, w_out) block is w_kw[kw] when
    w_in == w_out + kw - 1, zero otherwise (implements the W-direction zero padding)."""
    _, Cin, Cout = w_kw.shape
    w_in = jnp.arange(W)[:, None]
    w_out = jnp.arange(W)[None, :]
    big = jnp.zeros((W, Cin, W, Cout), jnp.float32)
    for kw in range(3):
        m = (w_in == (w_out + kw - 1)).astype(jnp.float32)           # (W, W)
        big = big + m[:, None, :, None] * w_kw[kw][None, :, None, :]
    return big.reshape(W * Cin, W * Cout)


def _block_diag_w_matrix(wd, W):
    """wd: (Cin, Cout) 1x1-conv weight (BN-scaled, f32) -> block-diagonal (W*Cin, W*Cout)."""
    Cin, Cout = wd.shape
    eye = jnp.eye(W, dtype=jnp.float32)
    big = eye[:, None, :, None] * wd[None, :, None, :]
    return big.reshape(W * Cin, W * Cout)


def _replicated_spec(arr):
    nd = arr.ndim
    return pl.BlockSpec(arr.shape, lambda n, _nd=nd: (0,) * _nd)


def _pick_block_batch(N, max_b=8):
    """Largest per-step batch <= max_b that divides N and keeps >= 2 grid steps
    (so v7x's two TensorCores both get work); caps VMEM growth on v7x."""
    best = 1
    for b in range(1, max_b + 1):
        if N % b == 0 and N // b >= 2:
            best = b
    return best


# ----------------------------------------------------------------------------
# Entry points
# ----------------------------------------------------------------------------
def cifar_se_basic_block_nhwc(x_nhwc, params, block_batch=None):
    """Fused SE basic block, NHWC in / NHWC out (no layout transposes)."""
    N, H, W, Cin = x_nhwc.shape
    planes = params["w_conv1"].shape[-1]
    hidden = params["se_w1"].shape[-1]
    has_down = "w_down" in params
    assert hidden >= 1
    if not has_down:
        assert Cin == planes, "identity residual requires inplanes == planes"
    # TODO(synk): stride > 1 (stride-2 downsample blocks) not supported by this kernel.

    B = block_batch if block_batch is not None else _pick_block_batch(N)
    assert N % B == 0

    f32, bf16 = jnp.float32, jnp.bfloat16

    # Fold BN scales into conv weights in f32, build banded weights, cast bf16 once.
    w1 = params["w_conv1"].astype(f32) * params["bn1_scale"].astype(f32)[None, None, None, :]
    w2 = params["w_conv2"].astype(f32) * params["bn2_scale"].astype(f32)[None, None, None, :]
    w1_band = jnp.concatenate([_banded_w_matrix(w1[kh], W) for kh in range(3)],
                              axis=0).astype(bf16)           # (3*W*Cin, W*planes)
    w2_band = jnp.concatenate([_banded_w_matrix(w2[kh], W) for kh in range(3)],
                              axis=0).astype(bf16)           # (3*W*planes, W*planes)
    b1_lane = jnp.tile(params["bn1_bias"].astype(f32), W).reshape(1, W * planes)
    b2_lane = jnp.tile(params["bn2_bias"].astype(f32), W).reshape(1, W * planes)

    args = [x_nhwc.reshape(N, H, W * Cin), w1_band, b1_lane, w2_band, b2_lane]
    if has_down:
        wd = params["w_down"].astype(f32) * params["bnd_scale"].astype(f32)[None, :]
        args += [_block_diag_w_matrix(wd, W).astype(bf16),    # (W*Cin, W*planes)
                 jnp.tile(params["bnd_bias"].astype(f32), W).reshape(1, W * planes)]
    args += [
        params["se_w1"].astype(f32).T,                        # (hidden, planes)
        params["se_b1"].astype(f32).reshape(1, hidden),
        params["se_w2"].astype(f32),                          # (hidden, planes)
        params["se_b2"].astype(f32).reshape(1, planes),
    ]

    in_specs = [pl.BlockSpec((B, H, W * Cin), lambda n: (n, 0, 0))]
    in_specs += [_replicated_spec(a) for a in args[1:]]

    kernel = _make_se_block_kernel(B, H, W, Cin, planes, hidden, has_down)

    flops = 2 * N * H * W * (9 * Cin * planes + 9 * planes * planes
                             + (Cin * planes if has_down else 0)
                             + 2 * planes * hidden)
    bytes_accessed = (x_nhwc.size + N * H * W * planes) * 4
    bytes_accessed += sum(int(a.size) * a.dtype.itemsize for a in args[1:])

    out = pl.pallas_call(
        kernel,
        grid=(N // B,),
        in_specs=in_specs,
        out_specs=pl.BlockSpec((B, H, W * planes), lambda n: (n, 0, 0)),
        out_shape=jax.ShapeDtypeStruct((N, H, W * planes), x_nhwc.dtype),
        compiler_params=pltpu.CompilerParams(
            dimension_semantics=("parallel",),
            vmem_limit_bytes=64 * 1024 * 1024,
        ),
        cost_estimate=pl.CostEstimate(
            flops=int(flops),
            transcendentals=int(N * planes),
            bytes_accessed=int(bytes_accessed)),
    )(*args)

    return out.reshape(N, H, W, planes)


def cifar_se_basic_block(x_nchw, params, block_batch=None):
    """PyTorch-layout convenience wrapper (NCHW in/out). Prefer the NHWC entry point in
    NHWC pipelines to avoid these two layout transposes."""
    x = jnp.transpose(x_nchw, (0, 2, 3, 1))
    y = cifar_se_basic_block_nhwc(x, params, block_batch=block_batch)
    return jnp.transpose(y, (0, 3, 1, 2))


# ----------------------------------------------------------------------------
# Parameter construction / BN folding (plain-JAX glue)
# ----------------------------------------------------------------------------
def fold_bn(gamma, beta, mean, var, eps=1e-5):
    scale = gamma / jnp.sqrt(var + eps)
    bias = beta - mean * scale
    return scale, bias


def make_params(key, inplanes, planes, reduction):
    hidden = planes // reduction
    ks = jax.random.split(key, 16)

    def bn_params(k, c):
        k1, k2, k3, k4 = jax.random.split(k, 4)
        gamma = 1.0 + 0.1 * jax.random.normal(k1, (c,), jnp.float32)
        beta = 0.1 * jax.random.normal(k2, (c,), jnp.float32)
        mean = 0.1 * jax.random.normal(k3, (c,), jnp.float32)
        var = 1.0 + 0.1 * jnp.abs(jax.random.normal(k4, (c,), jnp.float32))
        return fold_bn(gamma, beta, mean, var)

    p = {}
    p["w_conv1"] = 0.1 * jax.random.normal(ks[0], (3, 3, inplanes, planes), jnp.float32)
    p["bn1_scale"], p["bn1_bias"] = bn_params(ks[1], planes)
    p["w_conv2"] = 0.1 * jax.random.normal(ks[2], (3, 3, planes, planes), jnp.float32)
    p["bn2_scale"], p["bn2_bias"] = bn_params(ks[3], planes)
    p["se_w1"] = 0.1 * jax.random.normal(ks[4], (planes, hidden), jnp.float32)
    p["se_b1"] = 0.1 * jax.random.normal(ks[5], (hidden,), jnp.float32)
    p["se_w2"] = 0.1 * jax.random.normal(ks[6], (hidden, planes), jnp.float32)
    p["se_b2"] = 0.1 * jax.random.normal(ks[7], (planes,), jnp.float32)
    if inplanes != planes:
        p["w_down"] = 0.1 * jax.random.normal(ks[8], (inplanes, planes), jnp.float32)
        p["bnd_scale"], p["bnd_bias"] = bn_params(ks[9], planes)
    return p


# ----------------------------------------------------------------------------
# Pure-JAX reference (f32) for correctness checks
# ----------------------------------------------------------------------------
def _reference_block_nhwc(x, p):
    def conv3x3(inp, w):
        return jax.lax.conv_general_dilated(
            inp, w, window_strides=(1, 1), padding="SAME",
            dimension_numbers=("NHWC", "HWIO", "NHWC"))

    if "w_down" in p:
        res = jnp.einsum("nhwc,cd->nhwd", x, p["w_down"])
        res = res * p["bnd_scale"] + p["bnd_bias"]
    else:
        res = x
    out = conv3x3(x, p["w_conv1"]) * p["bn1_scale"] + p["bn1_bias"]
    out = jnp.maximum(out, 0.0)
    out = conv3x3(out, p["w_conv2"]) * p["bn2_scale"] + p["bn2_bias"]
    pooled = out.mean(axis=(1, 2))
    h = jnp.maximum(pooled @ p["se_w1"] + p["se_b1"], 0.0)
    s = jax.nn.sigmoid(h @ p["se_w2"] + p["se_b2"])
    out = out * s[:, None, None, :] + res
    return jnp.maximum(out, 0.0)


if __name__ == "__main__":
    key = jax.random.PRNGKey(0)
    k_x1, k_p1, k_x2, k_p2 = jax.random.split(key, 4)

    fwd = jax.jit(cifar_se_basic_block_nhwc)

    # Test 1: downsample path (inplanes != planes). B is chosen as 4 -> grid = (2,).
    N, H, W = 8, 8, 8
    inplanes, planes, reduction = 16, 32, 16
    x1 = jax.random.normal(k_x1, (N, H, W, inplanes), jnp.float32)
    p1 = make_params(k_p1, inplanes, planes, reduction)
    y1 = fwd(x1, p1)
    jax.block_until_ready(y1)
    assert y1.shape == (N, H, W, planes), y1.shape
    err1 = float(jnp.max(jnp.abs(y1 - _reference_block_nhwc(x1, p1))))
    assert err1 < 1e-1, f"max abs error (downsample path) {err1}"

    # Test 2: identity residual path (inplanes == planes).
    x2 = jax.random.normal(k_x2, (4, H, W, 16), jnp.float32)
    p2 = make_params(k_p2, 16, 16, 16)
    y2 = fwd(x2, p2)
    jax.block_until_ready(y2)
    assert y2.shape == (4, H, W, 16), y2.shape
    err2 = float(jnp.max(jnp.abs(y2 - _reference_block_nhwc(x2, p2))))
    assert err2 < 1e-1, f"max abs error (identity path) {err2}"

    print("KERNEL_OK")
</pallas_src>

<mosaic_0001>
module attributes {stable_mosaic.version = 11 : i64} {
  func.func @kernel(%arg0: i32, %arg1: memref<4x8x128xf32, #tpu.memory_space<vmem>>, %arg2: memref<384x256xbf16, #tpu.memory_space<vmem>>, %arg3: memref<1x256xf32, #tpu.memory_space<vmem>>, %arg4: memref<768x256xbf16, #tpu.memory_space<vmem>>, %arg5: memref<1x256xf32, #tpu.memory_space<vmem>>, %arg6: memref<128x256xbf16, #tpu.memory_space<vmem>>, %arg7: memref<1x256xf32, #tpu.memory_space<vmem>>, %arg8: memref<2x32xf32, #tpu.memory_space<vmem>>, %arg9: memref<1x2xf32, #tpu.memory_space<vmem>>, %arg10: memref<2x32xf32, #tpu.memory_space<vmem>>, %arg11: memref<1x32xf32, #tpu.memory_space<vmem>>, %arg12: memref<4x8x256xf32, #tpu.memory_space<vmem>>) attributes {dimension_semantics = [#tpu.dimension_semantics<parallel>], iteration_bounds = array<i64: 2>, scalar_prefetch = 0 : i64, scratch_operands = 0 : i64, tpu.core_type = #tpu.core_type<tc>, window_params = [{transform_indices = @transform_0, window_bounds = array<i64: 4, 8, 128>}, {pipeline_mode = #tpu.pipeline_mode<synchronous>, transform_indices = @transform_1, window_bounds = array<i64: 384, 256>}, {pipeline_mode = #tpu.pipeline_mode<synchronous>, transform_indices = @transform_2, window_bounds = array<i64: 1, 256>}, {pipeline_mode = #tpu.pipeline_mode<synchronous>, transform_indices = @transform_3, window_bounds = array<i64: 768, 256>}, {pipeline_mode = #tpu.pipeline_mode<synchronous>, transform_indices = @transform_4, window_bounds = array<i64: 1, 256>}, {pipeline_mode = #tpu.pipeline_mode<synchronous>, transform_indices = @transform_5, window_bounds = array<i64: 128, 256>}, {pipeline_mode = #tpu.pipeline_mode<synchronous>, transform_indices = @transform_6, window_bounds = array<i64: 1, 256>}, {pipeline_mode = #tpu.pipeline_mode<synchronous>, transform_indices = @transform_7, window_bounds = array<i64: 2, 32>}, {pipeline_mode = #tpu.pipeline_mode<synchronous>, transform_indices = @transform_8, window_bounds = array<i64: 1, 2>}, {pipeline_mode = #tpu.pipeline_mode<synchronous>, transform_indices = @transform_9, window_bounds = array<i64: 2, 32>}, {pipeline_mode = #tpu.pipeline_mode<synchronous>, transform_indices = @transform_10, window_bounds = array<i64: 1, 32>}, {transform_indices = @transform_11, window_bounds = array<i64: 4, 8, 256>}]} {
    %c0 = arith.constant 0 : index
    %c0_0 = arith.constant 0 : index
    %c0_1 = arith.constant 0 : index
    %0 = vector.load %arg1[%c0, %c0_0, %c0_1] : memref<4x8x128xf32, #tpu.memory_space<vmem>>, vector<4x8x128xf32>
    %1 = vector.shape_cast %0 : vector<4x8x128xf32> to vector<32x128xf32>
    %2 = tpu.iota {dimensions = array<i32: 0>} : vector<32x1xi32>
    %c8_i32 = arith.constant 8 : i32
    %c0_i32 = arith.constant 0 : i32
    %3 = arith.cmpi eq, %c8_i32, %c0_i32 : i32
    %c1_i32 = arith.constant 1 : i32
    %4 = arith.select %3, %c1_i32, %c8_i32 : i32
    %5 = vector.broadcast %4 : i32 to vector<32x1xi32>
    %6 = arith.remsi %2, %5 : vector<32x1xi32>
    %c0_i32_2 = arith.constant 0 : i32
    %7 = vector.broadcast %c0_i32_2 : i32 to vector<32x1xi32>
    %8 = arith.cmpi ne, %6, %7 : vector<32x1xi32>
    %c0_i32_3 = arith.constant 0 : i32
    %9 = vector.broadcast %c0_i32_3 : i32 to vector<32x1xi32>
    %10 = arith.cmpi slt, %6, %9 : vector<32x1xi32>
    %c0_i32_4 = arith.constant 0 : i32
    %11 = arith.cmpi slt, %4, %c0_i32_4 : i32
    %12 = vector.broadcast %11 : i1 to vector<32x1xi1>
    %13 = vector.broadcast %12 : vector<32x1xi1> to vector<32x1xi1>
    %14 = arith.xori %10, %13 : vector<32x1xi1>
    %15 = arith.andi %14, %8 : vector<32x1xi1>
    %16 = vector.broadcast %4 : i32 to vector<32x1xi32>
    %17 = arith.addi %6, %16 : vector<32x1xi32>
    %18 = arith.select %15, %17, %6 : vector<32x1xi1>, vector<32x1xi32>
    %c1_i32_5 = arith.constant 1 : i32
    %19 = vector.broadcast %c1_i32_5 : i32 to vector<32x1xi32>
    %20 = arith.cmpi sge, %18, %19 : vector<32x1xi32>
    %c7_i32 = arith.constant 7 : i32
    %21 = vector.broadcast %c7_i32 : i32 to vector<32x1xi32>
    %22 = arith.cmpi slt, %18, %21 : vector<32x1xi32>
    %cst = arith.constant 0.000000e+00 : f32
    %23 = vector.broadcast %cst : f32 to vector<1x128xf32>
    %24 = vector.extract_strided_slice %1 {offsets = [0, 0], sizes = [31, 128], strides = [1, 1]} : vector<32x128xf32> to vector<31x128xf32>
    %25 = tpu.concatenate %23, %24 in 0 : vector<1x128xf32>, vector<31x128xf32> -> vector<32x128xf32>
    %26 = vector.extract_strided_slice %1 {offsets = [1, 0], sizes = [31, 128], strides = [1, 1]} : vector<32x128xf32> to vector<31x128xf32>
    %27 = tpu.concatenate %26, %23 in 0 : vector<31x128xf32>, vector<1x128xf32> -> vector<32x128xf32>
    %cst_6 = arith.constant 0.000000e+00 : f32
    %28 = vector.shape_cast %20 : vector<32x1xi1> to vector<32x1xi1>
    %29 = vector.broadcast %28 : vector<32x1xi1> to vector<32x128xi1>
    %30 = vector.broadcast %cst_6 : f32 to vector<32x128xf32>
    %31 = arith.select %29, %25, %30 : vector<32x128xi1>, vector<32x128xf32>
    %cst_7 = arith.constant 0.000000e+00 : f32
    %32 = vector.shape_cast %22 : vector<32x1xi1> to vector<32x1xi1>
    %33 = vector.broadcast %32 : vector<32x1xi1> to vector<32x128xi1>
    %34 = vector.broadcast %cst_7 : f32 to vector<32x128xf32>
    %35 = arith.select %33, %27, %34 : vector<32x128xi1>, vector<32x128xf32>
    %36 = tpu.concatenate %31, %1, %35 in 1 : vector<32x128xf32>, vector<32x128xf32>, vector<32x128xf32> -> vector<32x384xf32>
    %37 = arith.truncf %36 : vector<32x384xf32> to vector<32x384xbf16>
    %c0_8 = arith.constant 0 : index
    %c0_9 = arith.constant 0 : index
    %38 = vector.load %arg2[%c0_8, %c0_9] : memref<384x256xbf16, #tpu.memory_space<vmem>>, vector<384x256xbf16>
    %cst_10 = arith.constant dense<0.000000e+00> : vector<32x256xf32>
    %39 = tpu.matmul %37, %38, %cst_10 {dimension_numbers = #tpu.dot_dimension_numbers<[1], [0], [0], [1], [0, 0, 1, 1], [], []>} : vector<32x384xbf16>, vector<384x256xbf16>, vector<32x256xf32> -> vector<32x256xf32>
    %c0_11 = arith.constant 0 : index
    %c0_12 = arith.constant 0 : index
    %40 = vector.load %arg3[%c0_11, %c0_12] : memref<1x256xf32, #tpu.memory_space<vmem>>, vector<1x256xf32>
    %41 = vector.broadcast %40 : vector<1x256xf32> to vector<32x256xf32>
    %42 = arith.addf %39, %41 : vector<32x256xf32>
    %cst_13 = arith.constant 0.000000e+00 : f32
    %43 = vector.broadcast %cst_13 : f32 to vector<32x256xf32>
    %44 = arith.maximumf %42, %43 : vector<32x256xf32>
    %cst_14 = arith.constant 0.000000e+00 : f32
    %45 = vector.broadcast %cst_14 : f32 to vector<1x256xf32>
    %46 = vector.extract_strided_slice %44 {offsets = [0, 0], sizes = [31, 256], strides = [1, 1]} : vector<32x256xf32> to vector<31x256xf32>
    %47 = tpu.concatenate %45, %46 in 0 : vector<1x256xf32>, vector<31x256xf32> -> vector<32x256xf32>
    %48 = vector.extract_strided_slice %44 {offsets = [1, 0], sizes = [31, 256], strides = [1, 1]} : vector<32x256xf32> to vector<31x256xf32>
    %49 = tpu.concatenate %48, %45 in 0 : vector<31x256xf32>, vector<1x256xf32> -> vector<32x256xf32>
    %cst_15 = arith.constant 0.000000e+00 : f32
    %50 = vector.shape_cast %20 : vector<32x1xi1> to vector<32x1xi1>
    %51 = vector.broadcast %50 : vector<32x1xi1> to vector<32x256xi1>
    %52 = vector.broadcast %cst_15 : f32 to vector<32x256xf32>
    %53 = arith.select %51, %47, %52 : vector<32x256xi1>, vector<32x256xf32>
    %cst_16 = arith.constant 0.000000e+00 : f32
    %54 = vector.shape_cast %22 : vector<32x1xi1> to vector<32x1xi1>
    %55 = vector.broadcast %54 : vector<32x1xi1> to vector<32x256xi1>
    %56 = vector.broadcast %cst_16 : f32 to vector<32x256xf32>
    %57 = arith.select %55, %49, %56 : vector<32x256xi1>, vector<32x256xf32>
    %58 = tpu.concatenate %53, %44, %57 in 1 : vector<32x256xf32>, vector<32x256xf32>, vector<32x256xf32> -> vector<32x768xf32>
    %59 = arith.truncf %58 : vector<32x768xf32> to vector<32x768xbf16>
    %c0_17 = arith.constant 0 : index
    %c0_18 = arith.constant 0 : index
    %60 = vector.load %arg4[%c0_17, %c0_18] : memref<768x256xbf16, #tpu.memory_space<vmem>>, vector<768x256xbf16>
    %cst_19 = arith.constant dense<0.000000e+00> : vector<32x256xf32>
    %61 = tpu.matmul %59, %60, %cst_19 {dimension_numbers = #tpu.dot_dimension_numbers<[1], [0], [0], [1], [0, 0, 1, 1], [], []>} : vector<32x768xbf16>, vector<768x256xbf16>, vector<32x256xf32> -> vector<32x256xf32>
    %c0_20 = arith.constant 0 : index
    %c0_21 = arith.constant 0 : index
    %62 = vector.load %arg5[%c0_20, %c0_21] : memref<1x256xf32, #tpu.memory_space<vmem>>, vector<1x256xf32>
    %63 = vector.broadcast %62 : vector<1x256xf32> to vector<32x256xf32>
    %64 = arith.addf %61, %63 : vector<32x256xf32>
    %65 = vector.shape_cast %64 : vector<32x256xf32> to vector<4x8x256xf32>
    %cst_22 = arith.constant dense<0.000000e+00> : vector<4x256xf32>
    %66 = vector.multi_reduction <add>, %65, %cst_22 [1] : vector<4x8x256xf32> to vector<4x256xf32>
    %67 = vector.extract_strided_slice %66 {offsets = [0, 0], sizes = [4, 32], strides = [1, 1]} : vector<4x256xf32> to vector<4x32xf32>
    %68 = vector.extract_strided_slice %66 {offsets = [0, 32], sizes = [4, 32], strides = [1, 1]} : vector<4x256xf32> to vector<4x32xf32>
    %69 = arith.addf %67, %68 : vector<4x32xf32>
    %70 = vector.extract_strided_slice %66 {offsets = [0, 64], sizes = [4, 32], strides = [1, 1]} : vector<4x256xf32> to vector<4x32xf32>
    %71 = arith.addf %69, %70 : vector<4x32xf32>
    %72 = vector.extract_strided_slice %66 {offsets = [0, 96], sizes = [4, 32], strides = [1, 1]} : vector<4x256xf32> to vector<4x32xf32>
    %73 = arith.addf %71, %72 : vector<4x32xf32>
    %74 = vector.extract_strided_slice %66 {offsets = [0, 128], sizes = [4, 32], strides = [1, 1]} : vector<4x256xf32> to vector<4x32xf32>
    %75 = arith.addf %73, %74 : vector<4x32xf32>
    %76 = vector.extract_strided_slice %66 {offsets = [0, 160], sizes = [4, 32], strides = [1, 1]} : vector<4x256xf32> to vector<4x32xf32>
    %77 = arith.addf %75, %76 : vector<4x32xf32>
    %78 = vector.extract_strided_slice %66 {offsets = [0, 192], sizes = [4, 32], strides = [1, 1]} : vector<4x256xf32> to vector<4x32xf32>
    %79 = arith.addf %77, %78 : vector<4x32xf32>
    %80 = vector.extract_strided_slice %66 {offsets = [0, 224], sizes = [4, 32], strides = [1, 1]} : vector<4x256xf32> to vector<4x32xf32>
    %81 = arith.addf %79, %80 : vector<4x32xf32>
    %cst_23 = arith.constant 1.562500e-02 : f32
    %82 = vector.broadcast %cst_23 : f32 to vector<4x32xf32>
    %83 = arith.mulf %81, %82 : vector<4x32xf32>
    %c0_24 = arith.constant 0 : index
    %c0_25 = arith.constant 0 : index
    %84 = vector.load %arg11[%c0_24, %c0_25] : memref<1x32xf32, #tpu.memory_space<vmem>>, vector<1x32xf32>
    %c0_26 = arith.constant 0 : index
    %c0_27 = arith.constant 0 : index
    %85 = vector.load %arg8[%c0_26, %c0_27] : memref<2x32xf32, #tpu.memory_space<vmem>>, vector<1x32xf32>
    %86 = vector.broadcast %85 : vector<1x32xf32> to vector<4x32xf32>
    %87 = arith.mulf %83, %86 : vector<4x32xf32>
    %cst_28 = arith.constant dense<0.000000e+00> : vector<4xf32>
    %88 = vector.multi_reduction <add>, %87, %cst_28 [1] : vector<4x32xf32> to vector<4xf32>
    %89 = vector.shape_cast %88 : vector<4xf32> to vector<4x1xf32>
    %c0_29 = arith.constant 0 : index
    %c0_30 = arith.constant 0 : index
    %90 = vector.load %arg9[%c0_29, %c0_30] : memref<1x2xf32, #tpu.memory_space<vmem>>, vector<1x1xf32>
    %91 = vector.broadcast %90 : vector<1x1xf32> to vector<4x1xf32>
    %92 = arith.addf %89, %91 : vector<4x1xf32>
    %cst_31 = arith.constant 0.000000e+00 : f32
    %93 = vector.broadcast %cst_31 : f32 to vector<4x1xf32>
    %94 = arith.maximumf %92, %93 : vector<4x1xf32>
    %c0_32 = arith.constant 0 : index
    %c0_33 = arith.constant 0 : index
    %95 = vector.load %arg10[%c0_32, %c0_33] : memref<2x32xf32, #tpu.memory_space<vmem>>, vector<1x32xf32>
    %96 = vector.broadcast %94 : vector<4x1xf32> to vector<4x32xf32>
    %97 = vector.broadcast %95 : vector<1x32xf32> to vector<4x32xf32>
    %98 = arith.mulf %96, %97 : vector<4x32xf32>
    %99 = vector.broadcast %84 : vector<1x32xf32> to vector<4x32xf32>
    %100 = arith.addf %99, %98 : vector<4x32xf32>
    %c1 = arith.constant 1 : index
    %c0_34 = arith.constant 0 : index
    %101 = vector.load %arg8[%c1, %c0_34] : memref<2x32xf32, #tpu.memory_space<vmem>>, vector<1x32xf32>
    %102 = vector.broadcast %101 : vector<1x32xf32> to vector<4x32xf32>
    %103 = arith.mulf %83, %102 : vector<4x32xf32>
    %cst_35 = arith.constant dense<0.000000e+00> : vector<4xf32>
    %104 = vector.multi_reduction <add>, %103, %cst_35 [1] : vector<4x32xf32> to vector<4xf32>
    %105 = vector.shape_cast %104 : vector<4xf32> to vector<4x1xf32>
    %c0_36 = arith.constant 0 : index
    %c1_37 = arith.constant 1 : index
    %106 = vector.load %arg9[%c0_36, %c1_37] : memref<1x2xf32, #tpu.memory_space<vmem>>, vector<1x1xf32>
    %107 = vector.broadcast %106 : vector<1x1xf32> to vector<4x1xf32>
    %108 = arith.addf %105, %107 : vector<4x1xf32>
    %cst_38 = arith.constant 0.000000e+00 : f32
    %109 = vector.broadcast %cst_38 : f32 to vector<4x1xf32>
    %110 = arith.maximumf %108, %109 : vector<4x1xf32>
    %c1_39 = arith.constant 1 : index
    %c0_40 = arith.constant 0 : index
    %111 = vector.load %arg10[%c1_39, %c0_40] : memref<2x32xf32, #tpu.memory_space<vmem>>, vector<1x32xf32>
    %112 = vector.broadcast %110 : vector<4x1xf32> to vector<4x32xf32>
    %113 = vector.broadcast %111 : vector<1x32xf32> to vector<4x32xf32>
    %114 = arith.mulf %112, %113 : vector<4x32xf32>
    %115 = arith.addf %100, %114 : vector<4x32xf32>
    %116 = arith.negf %115 : vector<4x32xf32>
    %117 = math.exp %116 : vector<4x32xf32>
    %cst_41 = arith.constant 1.000000e+00 : f32
    %118 = vector.broadcast %cst_41 : f32 to vector<4x32xf32>
    %119 = arith.addf %118, %117 : vector<4x32xf32>
    %120 = arith.divf %118, %119 : vector<4x32xf32>
    %121 = tpu.concatenate %120, %120, %120, %120, %120, %120, %120, %120 in 1 : vector<4x32xf32>, vector<4x32xf32>, vector<4x32xf32>, vector<4x32xf32>, vector<4x32xf32>, vector<4x32xf32>, vector<4x32xf32>, vector<4x32xf32> -> vector<4x256xf32>
    %122 = arith.truncf %1 : vector<32x128xf32> to vector<32x128xbf16>
    %c0_42 = arith.constant 0 : index
    %c0_43 = arith.constant 0 : index
    %123 = vector.load %arg6[%c0_42, %c0_43] : memref<128x256xbf16, #tpu.memory_space<vmem>>, vector<128x256xbf16>
    %cst_44 = arith.constant dense<0.000000e+00> : vector<32x256xf32>
    %124 = tpu.matmul %122, %123, %cst_44 {dimension_numbers = #tpu.dot_dimension_numbers<[1], [0], [0], [1], [0, 0, 1, 1], [], []>} : vector<32x128xbf16>, vector<128x256xbf16>, vector<32x256xf32> -> vector<32x256xf32>
    %c0_45 = arith.constant 0 : index
    %c0_46 = arith.constant 0 : index
    %125 = vector.load %arg7[%c0_45, %c0_46] : memref<1x256xf32, #tpu.memory_space<vmem>>, vector<1x256xf32>
    %126 = vector.broadcast %125 : vector<1x256xf32> to vector<32x256xf32>
    %127 = arith.addf %124, %126 : vector<32x256xf32>
    %128 = vector.shape_cast %121 : vector<4x256xf32> to vector<4x1x256xf32>
    %129 = vector.broadcast %128 : vector<4x1x256xf32> to vector<4x8x256xf32>
    %130 = arith.mulf %65, %129 : vector<4x8x256xf32>
    %131 = vector.shape_cast %127 : vector<32x256xf32> to vector<4x8x256xf32>
    %132 = arith.addf %130, %131 : vector<4x8x256xf32>
    %cst_47 = arith.constant 0.000000e+00 : f32
    %133 = vector.broadcast %cst_47 : f32 to vector<4x8x256xf32>
    %134 = arith.maximumf %132, %133 : vector<4x8x256xf32>
    %c0_48 = arith.constant 0 : index
    %c0_49 = arith.constant 0 : index
    %c0_50 = arith.constant 0 : index
    %135 = vector.load %arg12[%c0_48, %c0_49, %c0_50] : memref<4x8x256xf32, #tpu.memory_space<vmem>>, vector<4x8x256xf32>
    tpu.vector_store %arg12[%c0_48, %c0_49, %c0_50], %134 {strides = array<i32>} : memref<4x8x256xf32, #tpu.memory_space<vmem>>, vector<4x8x256xf32>,
    return
  }
  func.func @transform_0(%arg0: i32) -> (i32, i32, i32) {
    %c0_i32 = arith.constant 0 : i32
    %c0_i32_0 = arith.constant 0 : i32
    %c0_i32_1 = arith.constant 0 : i32
    return %arg0, %c0_i32, %c0_i32_0 : i32, i32, i32
  }
  func.func @transform_1(%arg0: i32) -> (i32, i32) {
    %c0_i32 = arith.constant 0 : i32
    %c0_i32_0 = arith.constant 0 : i32
    %c0_i32_1 = arith.constant 0 : i32
    return %c0_i32, %c0_i32_0 : i32, i32
  }
  func.func @transform_2(%arg0: i32) -> (i32, i32) {
    %c0_i32 = arith.constant 0 : i32
    %c0_i32_0 = arith.constant 0 : i32
    %c0_i32_1 = arith.constant 0 : i32
    return %c0_i32, %c0_i32_0 : i32, i32
  }
  func.func @transform_3(%arg0: i32) -> (i32, i32) {
    %c0_i32 = arith.constant 0 : i32
    %c0_i32_0 = arith.constant 0 : i32
    %c0_i32_1 = arith.constant 0 : i32
    return %c0_i32, %c0_i32_0 : i32, i32
  }
  func.func @transform_4(%arg0: i32) -> (i32, i32) {
    %c0_i32 = arith.constant 0 : i32
    %c0_i32_0 = arith.constant 0 : i32
    %c0_i32_1 = arith.constant 0 : i32
    return %c0_i32, %c0_i32_0 : i32, i32
  }
  func.func @transform_5(%arg0: i32) -> (i32, i32) {
    %c0_i32 = arith.constant 0 : i32
    %c0_i32_0 = arith.constant 0 : i32
    %c0_i32_1 = arith.constant 0 : i32
    return %c0_i32, %c0_i32_0 : i32, i32
  }
  func.func @transform_6(%arg0: i32) -> (i32, i32) {
    %c0_i32 = arith.constant 0 : i32
    %c0_i32_0 = arith.constant 0 : i32
    %c0_i32_1 = arith.constant 0 : i32
    return %c0_i32, %c0_i32_0 : i32, i32
  }
  func.func @transform_7(%arg0: i32) -> (i32, i32) {
    %c0_i32 = arith.constant 0 : i32
    %c0_i32_0 = arith.constant 0 : i32
    %c0_i32_1 = arith.constant 0 : i32
    return %c0_i32, %c0_i32_0 : i32, i32
  }
  func.func @transform_8(%arg0: i32) -> (i32, i32) {
    %c0_i32 = arith.constant 0 : i32
    %c0_i32_0 = arith.constant 0 : i32
    %c0_i32_1 = arith.constant 0 : i32
    return %c0_i32, %c0_i32_0 : i32, i32
  }
  func.func @transform_9(%arg0: i32) -> (i32, i32) {
    %c0_i32 = arith.constant 0 : i32
    %c0_i32_0 = arith.constant 0 : i32
    %c0_i32_1 = arith.constant 0 : i32
    return %c0_i32, %c0_i32_0 : i32, i32
  }
  func.func @transform_10(%arg0: i32) -> (i32, i32) {
    %c0_i32 = arith.constant 0 : i32
    %c0_i32_0 = arith.constant 0 : i32
    %c0_i32_1 = arith.constant 0 : i32
    return %c0_i32, %c0_i32_0 : i32, i32
  }
  func.func @transform_11(%arg0: i32) -> (i32, i32, i32) {
    %c0_i32 = arith.constant 0 : i32
    %c0_i32_0 = arith.constant 0 : i32
    %c0_i32_1 = arith.constant 0 : i32
    return %arg0, %c0_i32, %c0_i32_0 : i32, i32, i32
  }
}

</mosaic_0001>

<llo_original>
// kernel: tile.18
$region0: #{tile.18}
  #allocation0 [shape = 's32[1]{0}', space=sflag, size = 0x4, scoped, tag = 'scoped memory for tile.18']
  %s0 = inlined_call_operand.vmem [shape: f32[32], index: 0, kind: input, shape index: {}]
  %s1 = inlined_call_operand.vmem [shape: f32[8,32], index: 1, kind: output, shape index: {}]
  // Predicated region
  $region2: #{tile.18} parent=0 // pred_check
    _
  $region3: #{tile.18} parent=0 // pred_check_branch
    %3 = sbr.rel (0) target = $region5
  $region4: #{tile.18} parent=0 // pred_region
    _
  $region5: #{tile.18} parent=0 // pred_fallthru
    _
  %v4 = vld [vmem:[%s0] ss:$0 sm:$0xff]
  %5 = vst [vmem:[%s1] sm:$0xff] %v4

// kernel: tile.19
$region0: #{tile.19}
  %s0 = inlined_call_operand.vmem [shape: f32[8,32], index: 0, kind: input, shape index: {}]
  %s1 = inlined_call_operand.hbm [shape: f32[1,256], index: 1, kind: output, shape index: {}]
  $region1: #{tile.19} parent=0
    #allocation0 [shape = 'u8[1024]{0}', space=vmem, size = 0x400, scoped, tag = 'operand span for operand 1']
    #allocation1 [shape = 's32[1]{0}', space=sflag, size = 0x4, scoped, tag = 'scoped memory for tile.19']
    #allocation2 [shape = 'u8[8192]{0}', space=vmem, size = 0x2000, scoped, tag = 'scoped mem for output reshape']
    %2 = vsyncpa [#allocation1], 0
    %s3 = smov 3
    %v4 = vld [vmem:[%s0] ss:$4 sm:%s3]
    %vm5 = vcmask 261120
    %6 = vst.msk [vmem:[#allocation2] ss:$8 sm:$0x3] %vm5, %v4
    %s7 = scalar_lea.vmem %s0, 3
    %s8 = smov 3
    %v9 = vld [vmem:[%s7] ss:$4 sm:%s8]
    %10 = vrot.lane.b32.xlu0 %v9, 96
    %v11 = vpop.permute.xlu0 %10
    %vm12 = vcmask 1048320
    %13 = vst.msk [vmem:[#allocation2] ss:$8 sm:$0x3] %vm12, %v11
    %s14 = scalar_lea.vmem %s0, 2
    %s15 = smov 3
    %v16 = vld [vmem:[%s14] ss:$4 sm:%s15]
    %17 = vrot.lane.b32.xlu0 %v16, 64
    %v18 = vpop.permute.xlu0 %17
    %vm19 = vcmask 785920
    %20 = vst.msk [vmem:[#allocation2] ss:$8 sm:$0x3] %vm19, %v18
    %s21 = scalar_lea.vmem %s0, 1
    %s22 = smov 3
    %v23 = vld [vmem:[%s21] ss:$4 sm:%s22]
    %24 = vrot.lane.b32.xlu0 %v23, 32
    %v25 = vpop.permute.xlu0 %24
    %vm26 = vcmask 523520
    %27 = vst.msk [vmem:[#allocation2] ss:$8 sm:$0x3] %vm26, %v25
    %s29 = sshllo.u32 0, 1
    %v31 = vld [vmem:[#allocation2] sm:%s29]
    %s32 = sshllo.u32 0, 1
    %33 = vst [vmem:[#allocation0] sm:%s32] %v31
    %s34 = scalar_lea.vmem [#allocation2], 8
    %v35 = vld [vmem:[%s34] sm:%s29]
    %s36 = sshllo.u32 0, 1
    %s37 = scalar_lea.vmem [#allocation0], 1
    %38 = vst [vmem:[%s37] sm:%s36] %v35
    %s40 = ssub.s32 32, 32
    %41 = vsyncadd [#allocation1], %s40
    %s43 = sshll.u32 [#allocation0], 4
    %s44 = int_to_ptr.vmem [resolvable:$true] %s43
    %46 = dma.vmem_to_hbm [thread:$0]  %s44, 32, %s1, [#allocation1]
    %47 = dma.done [#allocation1], 32
    %48 = vsyncpa [#allocation1], 1

// kernel: cifar_se_basic_block_nhwc.1
$region0: #{cifar_se_basic_block_nhwc.1}
  #allocation0 [shape = 'u32[]', space=smem, size = 0x4, offset = 0x4, fixed_abs, tag = 'smem constant byte address 0x4 - core index']
  #allocation1 [shape = 'u32[144,128]{1,0:T(1,128)}', space=vmem, size = 0x12000, scoped, tag = 'internal scratch']
  %s0 = inlined_call_operand.hbm [shape: f32[8,8,128], index: 0, kind: input, shape index: {}]
  %s1 = inlined_call_operand.hbm [shape: bf16[384,256], index: 1, kind: input, shape index: {}]
  %s2 = inlined_call_operand.hbm [shape: f32[1,256], index: 2, kind: input, shape index: {}]
  %s3 = inlined_call_operand.hbm [shape: bf16[768,256], index: 3, kind: input, shape index: {}]
  %s4 = inlined_call_operand.hbm [shape: f32[1,256], index: 4, kind: input, shape index: {}]
  %s5 = inlined_call_operand.hbm [shape: bf16[128,256], index: 5, kind: input, shape index: {}]
  %s6 = inlined_call_operand.hbm [shape: f32[1,256], index: 6, kind: input, shape index: {}]
  %s7 = inlined_call_operand.hbm [shape: f32[2,32], index: 7, kind: input, shape index: {}]
  %s8 = inlined_call_operand.hbm [shape: f32[1,2], index: 8, kind: input, shape index: {}]
  %s9 = inlined_call_operand.hbm [shape: f32[2,32], index: 9, kind: input, shape index: {}]
  %s10 = inlined_call_operand.hbm [shape: f32[1,32], index: 10, kind: input, shape index: {}]
  %s11 = inlined_call_operand.hbm [shape: f32[8,8,256], index: 11, kind: output, shape index: {}]
  %s12 = sld [smem:[#allocation0]]
  $region121: #{cifar_se_basic_block_nhwc.1} parent=0
    _
  %s14 = ssub.s32 1, %s12
  %s15 = scalar_select 0, %s14, %s12
  $region1: #{cifar_se_basic_block_nhwc.1} parent=0
    #allocation2 [shape = 'u8[32768]{0}', space=vmem, size = 0x8000, scoped, tag = 'input window, operand 0']
    #allocation3 [shape = 's32[2]{0}', space=sflag, size = 0x8, scoped, tag = 'scoped memory for cifar_se_basic_block_nhwc.1']
    #allocation4 [shape = 's32[2]{0}', space=sflag, size = 0x8, scoped, tag = 'scoped memory for cifar_se_basic_block_nhwc.1']
    #allocation5 [shape = 'u8[196608]{0}', space=vmem, size = 0x30000, scoped, tag = 'input window, operand 1, single buffered']
    #allocation6 [shape = 's32[1]{0}', space=sflag, size = 0x4, scoped, tag = 'scoped memory for cifar_se_basic_block_nhwc.1']
    #allocation7 [shape = 'u8[1024]{0}', space=vmem, size = 0x400, scoped, tag = 'input window, operand 2, single buffered']
    #allocation8 [shape = 'u8[393216]{0}', space=vmem, size = 0x60000, scoped, tag = 'input window, operand 3, single buffered']
    #allocation9 [shape = 's32[1]{0}', space=sflag, size = 0x4, scoped, tag = 'scoped memory for cifar_se_basic_block_nhwc.1']
    #allocation10 [shape = 'u8[1024]{0}', space=vmem, size = 0x400, scoped, tag = 'input window, operand 4, single buffered']
    #allocation11 [shape = 'u8[65536]{0}', space=vmem, size = 0x10000, scoped, tag = 'input window, operand 5, single buffered']
    #allocation12 [shape = 's32[1]{0}', space=sflag, size = 0x4, scoped, tag = 'scoped memory for cifar_se_basic_block_nhwc.1']
    #allocation13 [shape = 'u8[1024]{0}', space=vmem, size = 0x400, scoped, tag = 'input window, operand 6, single buffered']
    #allocation14 [shape = 'u8[1024]{0}', space=vmem, size = 0x400, scoped, tag = 'input window, operand 7, single buffered']
    #allocation15 [shape = 's32[1]{0}', space=sflag, size = 0x4, scoped, tag = 'scoped memory for cifar_se_basic_block_nhwc.1']
    #allocation16 [shape = 'u8[512]{0}', space=vmem, size = 0x400, scoped, tag = 'input window, operand 8, single buffered']
    #allocation17 [shape = 'u8[1024]{0}', space=vmem, size = 0x400, scoped, tag = 'input window, operand 9, single buffered']
    #allocation18 [shape = 's32[1]{0}', space=sflag, size = 0x4, scoped, tag = 'scoped memory for cifar_se_basic_block_nhwc.1']
    #allocation19 [shape = 'u8[512]{0}', space=vmem, size = 0x400, scoped, tag = 'input window, operand 10, single buffered']
    #allocation20 [shape = 'u8[65536]{0}', space=vmem, size = 0x10000, scoped, tag = 'output window, operand 0']
    %16 = vsyncpa [#allocation3], 0
    %s17 = scalar_lea.sflag [#allocation3], 1
    %18 = vsyncpa %s17, 0
    %19 = vsyncpa [#allocation6], 0
    %20 = vsyncpa [#allocation9], 0
    %21 = vsyncpa [#allocation12], 0
    %22 = vsyncpa [#allocation15], 0
    %23 = vsyncpa [#allocation18], 0
    %24 = vsyncpa [#allocation4], 0
    %s25 = scalar_lea.sflag [#allocation4], 1
    %26 = vsyncpa %s25, 0
    loop: start=0, step=1, limit=4
    $region2: #{cifar_se_basic_block_nhwc.1} parent=1 // loop_pre_header
      _
    $region3: #{cifar_se_basic_block_nhwc.1} parent=1 // loop_header
      %s28 = sphi 0, %s32
      %p29 = scmp.ge.s32.totalorder %s28, 4
      %s38 = sphi 0, %s40
      %s41 = sphi 0, %s38
      %s42 = sphi 0, %s41
      %s58 = sphi 0, %s42
      %s62 = sphi 0, %s62
      %s64 = sphi 0, %s62
      %s65 = sphi 0, %s64
      %s79 = sphi 0, %s65
      %s83 = sphi 0, %s83
      %s85 = sphi 0, %s83
      %s86 = sphi 0, %s85
      %s100 = sphi 0, %s86
      %s104 = sphi 0, %s104
      %s106 = sphi 0, %s104
      %s107 = sphi 0, %s106
      %s121 = sphi 0, %s107
      %s125 = sphi 0, %s125
      %s127 = sphi 0, %s125
      %s128 = sphi 0, %s127
      %s142 = sphi 0, %s128
      %s146 = sphi 0, %s146
      %s148 = sphi 0, %s146
      %s149 = sphi 0, %s148
      %s163 = sphi 0, %s149
      %s167 = sphi 0, %s167
      %s169 = sphi 0, %s167
      %s170 = sphi 0, %s169
      %s184 = sphi 0, %s170
      %s188 = sphi 0, %s188
      %s190 = sphi 0, %s188
      %s191 = sphi 0, %s190
      %s205 = sphi 0, %s191
      %s209 = sphi 0, %s209
      %s211 = sphi 0, %s209
      %s212 = sphi 0, %s211
      %s226 = sphi 0, %s212
      %s230 = sphi 0, %s230
      %s232 = sphi 0, %s230
      %s233 = sphi 0, %s232
      %s247 = sphi 0, %s233
      %s251 = sphi 0, %s251
      %s253 = sphi 0, %s251
      %s254 = sphi 0, %s253
      %s268 = sphi 0, %s254
      %s274 = sphi 0, %s276
      %s277 = sphi 0, %s274
      %s278 = sphi 0, %s277
      %s294 = sphi 0, %s278
    $region4: #{cifar_se_basic_block_nhwc.1} parent=1 // loop_header_branch
      %31 = sbr.rel (%p29) target = $region8
    $region5: #{cifar_se_basic_block_nhwc.1} parent=1 // loop_body
      %s33 = ssub.s32 %s28, 1
      %s34 = ssub.s32 %s28, 2
      %s35 = sadd.s32 %s28, 1
      %s36 = ssub.s32 %s28, %s35
      %p37 = scmp.eq.s32.totalorder %s36, 0
      %s39 = sadd.s32 %s38, 1
      %s40 = scalar_select %p37, %s38, %s39
      %p43 = pneg %p37
      %p44 = scmp.eq.s32.totalorder %s28, 1
      %p45 = por %p43, %p44
      %p46 = scmp.ne.s32.totalorder %s38, %s41
      %p47 = scmp.eq.s32.totalorder %s28, 0
      %p48 = por %p46, %p47
      %p49 = scmp.ne.s32.totalorder %s38, %s41
      %p50 = scmp.eq.s32.totalorder %s33, 1
      %p51 = por %p49, %p50
      %p52 = scmp.ne.s32.totalorder %s41, %s42
      %p53 = scmp.eq.s32.totalorder %s33, 0
      %p54 = por %p52, %p53
      %p55 = scmp.ne.s32.totalorder %s41, %s42
      %p56 = scmp.eq.s32.totalorder %s34, 1
      %p57 = por %p55, %p56
      %p59 = scmp.ne.s32.totalorder %s42, %s58
      %p60 = scmp.eq.s32.totalorder %s34, 0
      %p61 = por %p59, %p60
      %s63 = sadd.s32 %s62, 1
      %p66 = scmp.eq.s32.totalorder %s28, 1
      %p67 = scmp.ne.s32.totalorder %s62, %s64
      %p68 = scmp.eq.s32.totalorder %s28, 0
      %p69 = por %p67, %p68
      %p70 = scmp.ne.s32.totalorder %s62, %s64
      %p71 = scmp.eq.s32.totalorder %s33, 1
      %p72 = por %p70, %p71
      %p73 = scmp.ne.s32.totalorder %s64, %s65
      %p74 = scmp.eq.s32.totalorder %s33, 0
      %p75 = por %p73, %p74
      %p76 = scmp.ne.s32.totalorder %s64, %s65
      %p77 = scmp.eq.s32.totalorder %s34, 1
      %p78 = por %p76, %p77
      %p80 = scmp.ne.s32.totalorder %s65, %s79
      %p81 = scmp.eq.s32.totalorder %s34, 0
      %p82 = por %p80, %p81
      %s84 = sadd.s32 %s83, 1
      %p87 = scmp.eq.s32.totalorder %s28, 1
      %p88 = scmp.ne.s32.totalorder %s83, %s85
      %p89 = scmp.eq.s32.totalorder %s28, 0
      %p90 = por %p88, %p89
      %p91 = scmp.ne.s32.totalorder %s83, %s85
      %p92 = scmp.eq.s32.totalorder %s33, 1
      %p93 = por %p91, %p92
      %p94 = scmp.ne.s32.totalorder %s85, %s86
      %p95 = scmp.eq.s32.totalorder %s33, 0
      %p96 = por %p94, %p95
      %p97 = scmp.ne.s32.totalorder %s85, %s86
      %p98 = scmp.eq.s32.totalorder %s34, 1
      %p99 = por %p97, %p98
      %p101 = scmp.ne.s32.totalorder %s86, %s100
      %p102 = scmp.eq.s32.totalorder %s34, 0
      %p103 = por %p101, %p102
      %s105 = sadd.s32 %s104, 1
      %p108 = scmp.eq.s32.totalorder %s28, 1
      %p109 = scmp.ne.s32.totalorder %s104, %s106
      %p110 = scmp.eq.s32.totalorder %s28, 0
      %p111 = por %p109, %p110
      %p112 = scmp.ne.s32.totalorder %s104, %s106
      %p113 = scmp.eq.s32.totalorder %s33, 1
      %p114 = por %p112, %p113
      %p115 = scmp.ne.s32.totalorder %s106, %s107
      %p116 = scmp.eq.s32.totalorder %s33, 0
      %p117 = por %p115, %p116
      %p118 = scmp.ne.s32.totalorder %s106, %s107
      %p119 = scmp.eq.s32.totalorder %s34, 1
      %p120 = por %p118, %p119
      %p122 = scmp.ne.s32.totalorder %s107, %s121
      %p123 = scmp.eq.s32.totalorder %s34, 0
      %p124 = por %p122, %p123
      %s126 = sadd.s32 %s125, 1
      %p129 = scmp.eq.s32.totalorder %s28, 1
      %p130 = scmp.ne.s32.totalorder %s125, %s127
      %p131 = scmp.eq.s32.totalorder %s28, 0
      %p132 = por %p130, %p131
      %p133 = scmp.ne.s32.totalorder %s125, %s127
      %p134 = scmp.eq.s32.totalorder %s33, 1
      %p135 = por %p133, %p134
      %p136 = scmp.ne.s32.totalorder %s127, %s128
      %p137 = scmp.eq.s32.totalorder %s33, 0
      %p138 = por %p136, %p137
      %p139 = scmp.ne.s32.totalorder %s127, %s128
      %p140 = scmp.eq.s32.totalorder %s34, 1
      %p141 = por %p139, %p140
      %p143 = scmp.ne.s32.totalorder %s128, %s142
      %p144 = scmp.eq.s32.totalorder %s34, 0
      %p145 = por %p143, %p144
      %s147 = sadd.s32 %s146, 1
      %p150 = scmp.eq.s32.totalorder %s28, 1
      %p151 = scmp.ne.s32.totalorder %s146, %s148
      %p152 = scmp.eq.s32.totalorder %s28, 0
      %p153 = por %p151, %p152
      %p154 = scmp.ne.s32.totalorder %s146, %s148
      %p155 = scmp.eq.s32.totalorder %s33, 1
      %p156 = por %p154, %p155
      %p157 = scmp.ne.s32.totalorder %s148, %s149
      %p158 = scmp.eq.s32.totalorder %s33, 0
      %p159 = por %p157, %p158
      %p160 = scmp.ne.s32.totalorder %s148, %s149
      %p161 = scmp.eq.s32.totalorder %s34, 1
      %p162 = por %p160, %p161
      %p164 = scmp.ne.s32.totalorder %s149, %s163
      %p165 = scmp.eq.s32.totalorder %s34, 0
      %p166 = por %p164, %p165
      %s168 = sadd.s32 %s167, 1
      %p171 = scmp.eq.s32.totalorder %s28, 1
      %p172 = scmp.ne.s32.totalorder %s167, %s169
      %p173 = scmp.eq.s32.totalorder %s28, 0
      %p174 = por %p172, %p173
      %p175 = scmp.ne.s32.totalorder %s167, %s169
      %p176 = scmp.eq.s32.totalorder %s33, 1
      %p177 = por %p175, %p176
      %p178 = scmp.ne.s32.totalorder %s169, %s170
      %p179 = scmp.eq.s32.totalorder %s33, 0
      %p180 = por %p178, %p179
      %p181 = scmp.ne.s32.totalorder %s169, %s170
      %p182 = scmp.eq.s32.totalorder %s34, 1
      %p183 = por %p181, %p182
      %p185 = scmp.ne.s32.totalorder %s170, %s184
      %p186 = scmp.eq.s32.totalorder %s34, 0
      %p187 = por %p185, %p186
      %s189 = sadd.s32 %s188, 1
      %p192 = scmp.eq.s32.totalorder %s28, 1
      %p193 = scmp.ne.s32.totalorder %s188, %s190
      %p194 = scmp.eq.s32.totalorder %s28, 0
      %p195 = por %p193, %p194
      %p196 = scmp.ne.s32.totalorder %s188, %s190
      %p197 = scmp.eq.s32.totalorder %s33, 1
      %p198 = por %p196, %p197
      %p199 = scmp.ne.s32.totalorder %s190, %s191
      %p200 = scmp.eq.s32.totalorder %s33, 0
      %p201 = por %p199, %p200
      %p202 = scmp.ne.s32.totalorder %s190, %s191
      %p203 = scmp.eq.s32.totalorder %s34, 1
      %p204 = por %p202, %p203
      %p206 = scmp.ne.s32.totalorder %s191, %s205
      %p207 = scmp.eq.s32.totalorder %s34, 0
      %p208 = por %p206, %p207
      %s210 = sadd.s32 %s209, 1
      %p213 = scmp.eq.s32.totalorder %s28, 1
      %p214 = scmp.ne.s32.totalorder %s209, %s211
      %p215 = scmp.eq.s32.totalorder %s28, 0
      %p216 = por %p214, %p215
      %p217 = scmp.ne.s32.totalorder %s209, %s211
      %p218 = scmp.eq.s32.totalorder %s33, 1
      %p219 = por %p217, %p218
      %p220 = scmp.ne.s32.totalorder %s211, %s212
      %p221 = scmp.eq.s32.totalorder %s33, 0
      %p222 = por %p220, %p221
      %p223 = scmp.ne.s32.totalorder %s211, %s212
      %p224 = scmp.eq.s32.totalorder %s34, 1
      %p225 = por %p223, %p224
      %p227 = scmp.ne.s32.totalorder %s212, %s226
      %p228 = scmp.eq.s32.totalorder %s34, 0
      %p229 = por %p227, %p228
      %s231 = sadd.s32 %s230, 1
      %p234 = scmp.eq.s32.totalorder %s28, 1
      %p235 = scmp.ne.s32.totalorder %s230, %s232
      %p236 = scmp.eq.s32.totalorder %s28, 0
      %p237 = por %p235, %p236
      %p238 = scmp.ne.s32.totalorder %s230, %s232
      %p239 = scmp.eq.s32.totalorder %s33, 1
      %p240 = por %p238, %p239
      %p241 = scmp.ne.s32.totalorder %s232, %s233
      %p242 = scmp.eq.s32.totalorder %s33, 0
      %p243 = por %p241, %p242
      %p244 = scmp.ne.s32.totalorder %s232, %s233
      %p245 = scmp.eq.s32.totalorder %s34, 1
      %p246 = por %p244, %p245
      %p248 = scmp.ne.s32.totalorder %s233, %s247
      %p249 = scmp.eq.s32.totalorder %s34, 0
      %p250 = por %p248, %p249
      %s252 = sadd.s32 %s251, 1
      %p255 = scmp.eq.s32.totalorder %s28, 1
      %p256 = scmp.ne.s32.totalorder %s251, %s253
      %p257 = scmp.eq.s32.totalorder %s28, 0
      %p258 = por %p256, %p257
      %p259 = scmp.ne.s32.totalorder %s251, %s253
      %p260 = scmp.eq.s32.totalorder %s33, 1
      %p261 = por %p259, %p260
      %p262 = scmp.ne.s32.totalorder %s253, %s254
      %p263 = scmp.eq.s32.totalorder %s33, 0
      %p264 = por %p262, %p263
      %p265 = scmp.ne.s32.totalorder %s253, %s254
      %p266 = scmp.eq.s32.totalorder %s34, 1
      %p267 = por %p265, %p266
      %p269 = scmp.ne.s32.totalorder %s254, %s268
      %p270 = scmp.eq.s32.totalorder %s34, 0
      %p271 = por %p269, %p270
      %s272 = ssub.s32 %s28, %s35
      %p273 = scmp.eq.s32.totalorder %s272, 0
      %s275 = sadd.s32 %s274, 1
      %s276 = scalar_select %p273, %s274, %s275
      %p279 = pneg %p273
      %p280 = scmp.eq.s32.totalorder %s28, 1
      %p281 = por %p279, %p280
      %p282 = scmp.ne.s32.totalorder %s274, %s277
      %p283 = scmp.eq.s32.totalorder %s28, 0
      %p284 = por %p282, %p283
      %p285 = scmp.ne.s32.totalorder %s274, %s277
      %p286 = scmp.eq.s32.totalorder %s33, 1
      %p287 = por %p285, %p286
      %p288 = scmp.ne.s32.totalorder %s277, %s278
      %p289 = scmp.eq.s32.totalorder %s33, 0
      %p290 = por %p288, %p289
      %p291 = scmp.ne.s32.totalorder %s277, %s278
      %p292 = scmp.eq.s32.totalorder %s34, 1
      %p293 = por %p291, %p292
      %p295 = scmp.ne.s32.totalorder %s278, %s294
      %p296 = scmp.eq.s32.totalorder %s34, 0
      %p297 = por %p295, %p296
      %p298 = scmp.le.s32.totalorder 1, %s28
      %p299 = scmp.lt.s32.totalorder %s28, 3
      %p300 = pnand %p298, %p299
      %p301 = pneg %p300
      // Predicated region
      $region9: #{cifar_se_basic_block_nhwc.1} parent=5 // pred_check
        _
      $region10: #{cifar_se_basic_block_nhwc.1} parent=5 // pred_check_branch
        %303 = sbr.rel (%p300) target = $region12
      $region11: #{cifar_se_basic_block_nhwc.1} parent=5 // pred_region
        %s304 = ssub.s32 %s28, 1
        // Predicated region
        $region13: #{cifar_se_basic_block_nhwc.1} parent=11 // pred_check
          %p305 = pneg %p75
        $region14: #{cifar_se_basic_block_nhwc.1} parent=11 // pred_check_branch
          %307 = sbr.rel (%p305) target = $region16
        $region15: #{cifar_se_basic_block_nhwc.1} parent=11 // pred_region
          %s309 = ssub.s32 6144, 6144
          %310 = vsyncadd [#allocation6], %s309
          %s311 = sshll.u32 [#allocation5], 4
          %s312 = int_to_ptr.vmem [resolvable:$true] %s311
          %317 = dma.hbm_to_vmem [thread:$0]  %s1, 6144, %s312, [#allocation6], 128, 128, 8
        $region16: #{cifar_se_basic_block_nhwc.1} parent=11 // pred_fallthru
          _
        // Predicated region
        $region17: #{cifar_se_basic_block_nhwc.1} parent=11 // pred_check
          %p318 = pneg %p96
        $region18: #{cifar_se_basic_block_nhwc.1} parent=11 // pred_check_branch
          %320 = sbr.rel (%p318) target = $region20
        $region19: #{cifar_se_basic_block_nhwc.1} parent=11 // pred_region
          %s322 = ssub.s32 32, 32
          %323 = vsyncadd [#allocation6], %s322
          %s325 = sshll.u32 [#allocation7], 4
          %s326 = int_to_ptr.vmem [resolvable:$true] %s325
          %328 = dma.hbm_to_vmem [thread:$0]  %s2, 32, %s326, [#allocation6]
        $region20: #{cifar_se_basic_block_nhwc.1} parent=11 // pred_fallthru
          _
        // Predicated region
        $region21: #{cifar_se_basic_block_nhwc.1} parent=11 // pred_check
          %p329 = pneg %p117
        $region22: #{cifar_se_basic_block_nhwc.1} parent=11 // pred_check_branch
          %331 = sbr.rel (%p329) target = $region24
        $region23: #{cifar_se_basic_block_nhwc.1} parent=11 // pred_region
          %s333 = ssub.s32 12288, 12288
          %334 = vsyncadd [#allocation9], %s333
          %s335 = sshll.u32 [#allocation8], 4
          %s336 = int_to_ptr.vmem [resolvable:$true] %s335
          %341 = dma.hbm_to_vmem [thread:$0]  %s3, 12288, %s336, [#allocation9], 128, 128, 8
        $region24: #{cifar_se_basic_block_nhwc.1} parent=11 // pred_fallthru
          _
        // Predicated region
        $region25: #{cifar_se_basic_block_nhwc.1} parent=11 // pred_check
          %p342 = pneg %p138
        $region26: #{cifar_se_basic_block_nhwc.1} parent=11 // pred_check_branch
          %344 = sbr.rel (%p342) target = $region28
        $region27: #{cifar_se_basic_block_nhwc.1} parent=11 // pred_region
          %s346 = ssub.s32 32, 32
          %347 = vsyncadd [#allocation9], %s346
          %s349 = sshll.u32 [#allocation10], 4
          %s350 = int_to_ptr.vmem [resolvable:$true] %s349
          %352 = dma.hbm_to_vmem [thread:$0]  %s4, 32, %s350, [#allocation9]
        $region28: #{cifar_se_basic_block_nhwc.1} parent=11 // pred_fallthru
          _
        // Predicated region
        $region29: #{cifar_se_basic_block_nhwc.1} parent=11 // pred_check
          %p353 = pneg %p159
        $region30: #{cifar_se_basic_block_nhwc.1} parent=11 // pred_check_branch
          %355 = sbr.rel (%p353) target = $region32
        $region31: #{cifar_se_basic_block_nhwc.1} parent=11 // pred_region
          %s357 = ssub.s32 2048, 2048
          %358 = vsyncadd [#allocation12], %s357
          %s359 = sshll.u32 [#allocation11], 4
          %s360 = int_to_ptr.vmem [resolvable:$true] %s359
          %365 = dma.hbm_to_vmem [thread:$0]  %s5, 2048, %s360, [#allocation12], 128, 128, 8
        $region32: #{cifar_se_basic_block_nhwc.1} parent=11 // pred_fallthru
          _
        // Predicated region
        $region33: #{cifar_se_basic_block_nhwc.1} parent=11 // pred_check
          %p366 = pneg %p180
        $region34: #{cifar_se_basic_block_nhwc.1} parent=11 // pred_check_branch
          %368 = sbr.rel (%p366) target = $region36
        $region35: #{cifar_se_basic_block_nhwc.1} parent=11 // pred_region
          %s370 = ssub.s32 32, 32
          %371 = vsyncadd [#allocation12], %s370
          %s373 = sshll.u32 [#allocation13], 4
          %s374 = int_to_ptr.vmem [resolvable:$true] %s373
          %376 = dma.hbm_to_vmem [thread:$0]  %s6, 32, %s374, [#allocation12]
        $region36: #{cifar_se_basic_block_nhwc.1} parent=11 // pred_fallthru
          _
        // Predicated region
        $region37: #{cifar_se_basic_block_nhwc.1} parent=11 // pred_check
          %p377 = pneg %p201
        $region38: #{cifar_se_basic_block_nhwc.1} parent=11 // pred_check_branch
          %379 = sbr.rel (%p377) target = $region40
        $region39: #{cifar_se_basic_block_nhwc.1} parent=11 // pred_region
          %s381 = ssub.s32 32, 32
          %382 = vsyncadd [#allocation15], %s381
          %s384 = sshll.u32 [#allocation14], 4
          %s385 = int_to_ptr.vmem [resolvable:$true] %s384
          %387 = dma.hbm_to_vmem [thread:$0]  %s7, 32, %s385, [#allocation15]
        $region40: #{cifar_se_basic_block_nhwc.1} parent=11 // pred_fallthru
          _
        // Predicated region
        $region41: #{cifar_se_basic_block_nhwc.1} parent=11 // pred_check
          %p388 = pneg %p222
        $region42: #{cifar_se_basic_block_nhwc.1} parent=11 // pred_check_branch
          %390 = sbr.rel (%p388) target = $region44
        $region43: #{cifar_se_basic_block_nhwc.1} parent=11 // pred_region
          %s392 = ssub.s32 16, 16
          %393 = vsyncadd [#allocation15], %s392
          %s395 = sshll.u32 [#allocation16], 4
          %s396 = int_to_ptr.vmem [resolvable:$true] %s395
          %398 = dma.hbm_to_vmem [thread:$0]  %s8, 16, %s396, [#allocation15]
        $region44: #{cifar_se_basic_block_nhwc.1} parent=11 // pred_fallthru
          _
        // Predicated region
        $region45: #{cifar_se_basic_block_nhwc.1} parent=11 // pred_check
          %p399 = pneg %p243
        $region46: #{cifar_se_basic_block_nhwc.1} parent=11 // pred_check_branch
          %401 = sbr.rel (%p399) target = $region48
        $region47: #{cifar_se_basic_block_nhwc.1} parent=11 // pred_region
          %s403 = ssub.s32 32, 32
          %404 = vsyncadd [#allocation18], %s403
          %s406 = sshll.u32 [#allocation17], 4
          %s407 = int_to_ptr.vmem [resolvable:$true] %s406
          %409 = dma.hbm_to_vmem [thread:$0]  %s9, 32, %s407, [#allocation18]
        $region48: #{cifar_se_basic_block_nhwc.1} parent=11 // pred_fallthru
          _
        // Predicated region
        $region49: #{cifar_se_basic_block_nhwc.1} parent=11 // pred_check
          %p410 = pneg %p264
        $region50: #{cifar_se_basic_block_nhwc.1} parent=11 // pred_check_branch
          %412 = sbr.rel (%p410) target = $region52
        $region51: #{cifar_se_basic_block_nhwc.1} parent=11 // pred_region
          %s414 = ssub.s32 16, 16
          %415 = vsyncadd [#allocation18], %s414
          %s417 = sshll.u32 [#allocation19], 4
          %s418 = int_to_ptr.vmem [resolvable:$true] %s417
          %420 = dma.hbm_to_vmem [thread:$0]  %s10, 16, %s418, [#allocation18]
        $region52: #{cifar_se_basic_block_nhwc.1} parent=11 // pred_fallthru
          _
      $region12: #{cifar_se_basic_block_nhwc.1} parent=5 // pred_fallthru
        _
      %p421 = scmp.lt.s32.totalorder %s28, 2
      // Predicated region
      $region53: #{cifar_se_basic_block_nhwc.1} parent=5 // pred_check
        %p422 = pneg %p421
      $region54: #{cifar_se_basic_block_nhwc.1} parent=5 // pred_check_branch
        %424 = sbr.rel (%p422) target = $region56
      $region55: #{cifar_se_basic_block_nhwc.1} parent=5 // pred_region
        // Predicated region
        $region57: #{cifar_se_basic_block_nhwc.1} parent=55 // pred_check
          %p425 = pneg %p48
        $region58: #{cifar_se_basic_block_nhwc.1} parent=55 // pred_check_branch
          %427 = sbr.rel (%p425) target = $region60
        $region59: #{cifar_se_basic_block_nhwc.1} parent=55 // pred_region
          %s428 = sand.u32 %s38, 1
          %s429 = scalar_lea.sflag [#allocation3], %s428
          %s430 = sand.u32 %s38, 1
          %s431 = smul.addr %s430, 32
          %s432 = scalar_lea.vmem [#allocation2], %s431
          %s433 = smul.u32 4, %s28
          %s435 = ssub.s32 512, 512
          %436 = vsyncadd %s429, %s435
          %s437 = smul.addr %s433, 128
          %s438 = scalar_lea.hbm %s0, %s437
          %s439 = sshll.u32 %s432, 4
          %s440 = int_to_ptr.vmem [resolvable:$true] %s439
          %445 = dma.hbm_to_vmem [thread:$0]  %s438, 512, %s440, %s429, 128, 128, 8
        $region60: #{cifar_se_basic_block_nhwc.1} parent=55 // pred_fallthru
          _
      $region56: #{cifar_se_basic_block_nhwc.1} parent=5 // pred_fallthru
        _
      %p446 = scmp.le.s32.totalorder 1, %s28
      %p447 = scmp.lt.s32.totalorder %s28, 3
      %p448 = pnand %p446, %p447
      %p449 = pneg %p448
      // Predicated region
      $region61: #{cifar_se_basic_block_nhwc.1} parent=5 // pred_check
        _
      $region62: #{cifar_se_basic_block_nhwc.1} parent=5 // pred_check_branch
        %451 = sbr.rel (%p448) target = $region64
      $region63: #{cifar_se_basic_block_nhwc.1} parent=5 // pred_region
        %s452 = ssub.s32 %s28, 1
        %s453 = sand.u32 %s41, 1
        %s454 = scalar_lea.sflag [#allocation3], %s453
        %s455 = sand.u32 %s41, 1
        %s456 = smul.addr %s455, 32
        %s457 = scalar_lea.vmem [#allocation2], %s456
        // Predicated region
        $region65: #{cifar_se_basic_block_nhwc.1} parent=63 // pred_check
          %p458 = pneg %p54
        $region66: #{cifar_se_basic_block_nhwc.1} parent=63 // pred_check_branch
          %460 = sbr.rel (%p458) target = $region68
        $region67: #{cifar_se_basic_block_nhwc.1} parent=63 // pred_region
          %461 = dma.done %s454, 512
        $region68: #{cifar_se_basic_block_nhwc.1} parent=63 // pred_fallthru
          _
        // Predicated region
        $region69: #{cifar_se_basic_block_nhwc.1} parent=63 // pred_check
          %p462 = pneg %p75
        $region70: #{cifar_se_basic_block_nhwc.1} parent=63 // pred_check_branch
          %464 = sbr.rel (%p462) target = $region72
        $region71: #{cifar_se_basic_block_nhwc.1} parent=63 // pred_region
          %465 = dma.done [#allocation6], 6144
        $region72: #{cifar_se_basic_block_nhwc.1} parent=63 // pred_fallthru
          _
        // Predicated region
        $region73: #{cifar_se_basic_block_nhwc.1} parent=63 // pred_check
          %p466 = pneg %p96
        $region74: #{cifar_se_basic_block_nhwc.1} parent=63 // pred_check_branch
          %468 = sbr.rel (%p466) target = $region76
        $region75: #{cifar_se_basic_block_nhwc.1} parent=63 // pred_region
          %469 = dma.done [#allocation6], 32
        $region76: #{cifar_se_basic_block_nhwc.1} parent=63 // pred_fallthru
          _
        // Predicated region
        $region77: #{cifar_se_basic_block_nhwc.1} parent=63 // pred_check
          %p470 = pneg %p117
        $region78: #{cifar_se_basic_block_nhwc.1} parent=63 // pred_check_branch
          %472 = sbr.rel (%p470) target = $region80
        $region79: #{cifar_se_basic_block_nhwc.1} parent=63 // pred_region
          %473 = dma.done [#allocation9], 12288
        $region80: #{cifar_se_basic_block_nhwc.1} parent=63 // pred_fallthru
          _
        // Predicated region
        $region81: #{cifar_se_basic_block_nhwc.1} parent=63 // pred_check
          %p474 = pneg %p138
        $region82: #{cifar_se_basic_block_nhwc.1} parent=63 // pred_check_branch
          %476 = sbr.rel (%p474) target = $region84
        $region83: #{cifar_se_basic_block_nhwc.1} parent=63 // pred_region
          %477 = dma.done [#allocation9], 32
        $region84: #{cifar_se_basic_block_nhwc.1} parent=63 // pred_fallthru
          _
        // Predicated region
        $region85: #{cifar_se_basic_block_nhwc.1} parent=63 // pred_check
          %p478 = pneg %p159
        $region86: #{cifar_se_basic_block_nhwc.1} parent=63 // pred_check_branch
          %480 = sbr.rel (%p478) target = $region88
        $region87: #{cifar_se_basic_block_nhwc.1} parent=63 // pred_region
          %481 = dma.done [#allocation12], 2048
        $region88: #{cifar_se_basic_block_nhwc.1} parent=63 // pred_fallthru
          _
        // Predicated region
        $region89: #{cifar_se_basic_block_nhwc.1} parent=63 // pred_check
          %p482 = pneg %p180
        $region90: #{cifar_se_basic_block_nhwc.1} parent=63 // pred_check_branch
          %484 = sbr.rel (%p482) target = $region92
        $region91: #{cifar_se_basic_block_nhwc.1} parent=63 // pred_region
          %485 = dma.done [#allocation12], 32
        $region92: #{cifar_se_basic_block_nhwc.1} parent=63 // pred_fallthru
          _
        // Predicated region
        $region93: #{cifar_se_basic_block_nhwc.1} parent=63 // pred_check
          %p486 = pneg %p201
        $region94: #{cifar_se_basic_block_nhwc.1} parent=63 // pred_check_branch
          %488 = sbr.rel (%p486) target = $region96
        $region95: #{cifar_se_basic_block_nhwc.1} parent=63 // pred_region
          %489 = dma.done [#allocation15], 32
        $region96: #{cifar_se_basic_block_nhwc.1} parent=63 // pred_fallthru
          _
        // Predicated region
        $region97: #{cifar_se_basic_block_nhwc.1} parent=63 // pred_check
          %p490 = pneg %p222
        $region98: #{cifar_se_basic_block_nhwc.1} parent=63 // pred_check_branch
          %492 = sbr.rel (%p490) target = $region100
        $region99: #{cifar_se_basic_block_nhwc.1} parent=63 // pred_region
          %493 = dma.done [#allocation15], 16
        $region100: #{cifar_se_basic_block_nhwc.1} parent=63 // pred_fallthru
          _
        // Predicated region
        $region101: #{cifar_se_basic_block_nhwc.1} parent=63 // pred_check
          %p494 = pneg %p243
        $region102: #{cifar_se_basic_block_nhwc.1} parent=63 // pred_check_branch
          %496 = sbr.rel (%p494) target = $region104
        $region103: #{cifar_se_basic_block_nhwc.1} parent=63 // pred_region
          %497 = dma.done [#allocation18], 32
        $region104: #{cifar_se_basic_block_nhwc.1} parent=63 // pred_fallthru
          _
        // Predicated region
        $region105: #{cifar_se_basic_block_nhwc.1} parent=63 // pred_check
          %p498 = pneg %p264
        $region106: #{cifar_se_basic_block_nhwc.1} parent=63 // pred_check_branch
          %500 = sbr.rel (%p498) target = $region108
        $region107: #{cifar_se_basic_block_nhwc.1} parent=63 // pred_region
          %501 = dma.done [#allocation18], 16
        $region108: #{cifar_se_basic_block_nhwc.1} parent=63 // pred_fallthru
          _
        %s502 = sand.u32 %s41, 1
        %s503 = scalar_lea.sflag [#allocation3], %s502
        %s504 = sand.u32 %s41, 1
        %s505 = smul.addr %s504, 32
        %s506 = scalar_lea.vmem [#allocation2], %s505
        %p507 = pneg %p54
        %p508 = pneg %p51
        %p509 = pneg %p75
        %p510 = pneg %p72
        %p511 = pneg %p96
        %p512 = pneg %p93
        %p513 = pneg %p117
        %p514 = pneg %p114
        %p515 = pneg %p138
        %p516 = pneg %p135
        %p517 = pneg %p159
        %p518 = pneg %p156
        %p519 = pneg %p180
        %p520 = pneg %p177
        %p521 = pneg %p201
        %p522 = pneg %p198
        %p523 = pneg %p222
        %p524 = pneg %p219
        %p525 = pneg %p243
        %p526 = pneg %p240
        %p527 = pneg %p264
        %p528 = pneg %p261
        %p529 = pneg %p290
        %p530 = pneg %p287
        %s531 = sand.u32 %s277, 1
        %s532 = scalar_lea.sflag [#allocation4], %s531
        %s533 = sand.u32 %s277, 1
        %s534 = smul.addr %s533, 64
        %s535 = scalar_lea.vmem [#allocation20], %s534
        %s536 = smul.u32 4, %s33
        %s537 = smul.u32 4, %s33
        %v539 = vld [vmem:[%s457] sm:$0xff]
        %v540 = vld [vmem:[%s457 + $0x8] sm:$0xff]
        %v541 = vld [vmem:[%s457 + $0x10] sm:$0xff]
        %v542 = vld [vmem:[%s457 + $0x18] sm:$0xff]
        %v543 = vlaneseq
        %v544 = vshrl.u32 %v543, 7
        %v545 = vadd.s32 %v544, 8
        %v546 = vadd.s32 %v544, 16
        %v547 = vadd.s32 %v544, 24
        %vm548 = vcmp.lt.s32.totalorder %v544, 0
        %v549 = vsub.s32 0, %v544
        %v550 = vsel %vm548, %v549, %v544
        %v551 = vshrl.u32 %v550, 3
        %v552 = vand.u32 %v550, 7
        %v553 = vsub.s32 0, %v552
        %v554 = vsel %vm548, %v553, %v552
        %vm555 = vcmp.lt.s32.totalorder %v545, 0
        %v556 = vsub.s32 0, %v545
        %v557 = vsel %vm555, %v556, %v545
        %v558 = vshrl.u32 %v557, 3
        %v559 = vand.u32 %v557, 7
        %v560 = vsub.s32 0, %v559
        %v561 = vsel %vm555, %v560, %v559
        %vm562 = vcmp.lt.s32.totalorder %v546, 0
        %v563 = vsub.s32 0, %v546
        %v564 = vsel %vm562, %v563, %v546
        %v565 = vshrl.u32 %v564, 3
        %v566 = vand.u32 %v564, 7
        %v567 = vsub.s32 0, %v566
        %v568 = vsel %vm562, %v567, %v566
        %vm569 = vcmp.lt.s32.totalorder %v547, 0
        %v570 = vsub.s32 0, %v547
        %v571 = vsel %vm569, %v570, %v547
        %v572 = vshrl.u32 %v571, 3
        %v573 = vand.u32 %v571, 7
        %v574 = vsub.s32 0, %v573
        %v575 = vsel %vm569, %v574, %v573
        %vm576 = vcmp.ne.s32.totalorder %v554, 0
        %vm577 = vcmp.ne.s32.totalorder %v561, 0
        %vm578 = vcmp.ne.s32.totalorder %v568, 0
        %vm579 = vcmp.ne.s32.totalorder %v575, 0
        %vm580 = vcmp.lt.s32.totalorder %v554, 0
        %vm581 = vcmp.lt.s32.totalorder %v561, 0
        %vm582 = vcmp.lt.s32.totalorder %v568, 0
        %vm583 = vcmp.lt.s32.totalorder %v575, 0
        %vm584 = vmand %vm580, %vm576
        %vm585 = vmand %vm581, %vm577
        %vm586 = vmand %vm582, %vm578
        %vm587 = vmand %vm583, %vm579
        %v588 = vadd.s32 %v554, 8
        %v589 = vadd.s32 %v561, 8
        %v590 = vadd.s32 %v568, 8
        %v591 = vadd.s32 %v575, 8
        %v592 = vsel %vm584, %v588, %v554
        %v593 = vsel %vm585, %v589, %v561
        %v594 = vsel %vm586, %v590, %v568
        %v595 = vsel %vm587, %v591, %v575
        %vm596 = vcmp.ge.s32.totalorder %v592, 1
        %vm597 = vcmp.ge.s32.totalorder %v593, 1
        %vm598 = vcmp.ge.s32.totalorder %v594, 1
        %vm599 = vcmp.ge.s32.totalorder %v595, 1
        %vm600 = vcmp.lt.s32.totalorder %v592, 7
        %vm601 = vcmp.lt.s32.totalorder %v593, 7
        %vm602 = vcmp.lt.s32.totalorder %v594, 7
        %vm603 = vcmp.lt.s32.totalorder %v595, 7
        %vm608 = vcmask 1040384
        %v609 = vrot.slane %v539, 7
        %v610 = vrot.slane %v540, 7
        %v611 = vsel %vm608, %v609, %v610
        %v612 = vrot.slane %v541, 7
        %v613 = vsel %vm608, %v610, %v612
        %v614 = vrot.slane %v542, 7
        %v615 = vsel %vm608, %v612, %v614
        %v620 = vsel %vm608, 0.0, %v609
        %vm621 = vcmask 1046528
        %v622 = vrot.slane %v539, 1
        %v623 = vrot.slane %v540, 1
        %v624 = vsel %vm621, %v622, %v623
        %v625 = vrot.slane %v541, 1
        %v626 = vsel %vm621, %v623, %v625
        %v627 = vrot.slane %v542, 1
        %v628 = vsel %vm621, %v625, %v627
        %v633 = vsel %vm621, %v627, 0.0
        %v634 = vsel %vm596, 1, 0
        %v635 = vsel %vm597, 1, 0
        %v636 = vsel %vm598, 1, 0
        %v637 = vsel %vm599, 1, 0
        %vm638 = vcmp.eq.s32.totalorder %v634, 1
        %vm639 = vcmp.eq.s32.totalorder %v635, 1
        %vm640 = vcmp.eq.s32.totalorder %v636, 1
        %vm641 = vcmp.eq.s32.totalorder %v637, 1
        %v642 = vsel %vm638, %v620, 0.0
        %v643 = vsel %vm639, %v611, 0.0
        %v644 = vsel %vm640, %v613, 0.0
        %v645 = vsel %vm641, %v615, 0.0
        %v646 = vsel %vm600, 1, 0
        %v647 = vsel %vm601, 1, 0
        %v648 = vsel %vm602, 1, 0
        %v649 = vsel %vm603, 1, 0
        %vm650 = vcmp.eq.s32.totalorder %v646, 1
        %vm651 = vcmp.eq.s32.totalorder %v647, 1
        %vm652 = vcmp.eq.s32.totalorder %v648, 1
        %vm653 = vcmp.eq.s32.totalorder %v649, 1
        %v654 = vsel %vm650, %v624, 0.0
        %v655 = vsel %vm651, %v626, 0.0
        %v656 = vsel %vm652, %v628, 0.0
        %v657 = vsel %vm653, %v633, 0.0
        %v658 = vpack.c.bf16 %v643, %v642
        %v659 = vpack.c.bf16 %v540, %v539
        %v660 = vpack.c.bf16 %v655, %v654
        %v661 = vpack.c.bf16 %v645, %v644
        %v662 = vpack.c.bf16 %v542, %v541
        %v663 = vpack.c.bf16 %v657, %v656
        %v664 = vld [vmem:[#allocation5] sm:$0xff]
        %v665 = vld [vmem:[#allocation5 + $0x8] sm:$0xff]
        %v666 = vld [vmem:[#allocation5 + $0x10] sm:$0xff]
        %v667 = vld [vmem:[#allocation5 + $0x18] sm:$0xff]
        %v668 = vld [vmem:[#allocation5 + $0x20] sm:$0xff]
        %v669 = vld [vmem:[#allocation5 + $0x28] sm:$0xff]
        %v670 = vld [vmem:[#allocation5 + $0x30] sm:$0xff]
        %v671 = vld [vmem:[#allocation5 + $0x38] sm:$0xff]
        %v672 = vld [vmem:[#allocation5 + $0x40] sm:$0xff]
        %v673 = vld [vmem:[#allocation5 + $0x48] sm:$0xff]
        %v674 = vld [vmem:[#allocation5 + $0x50] sm:$0xff]
        %v675 = vld [vmem:[#allocation5 + $0x58] sm:$0xff]
        %v676 = vld [vmem:[#allocation5 + $0x60] sm:$0xff]
        %v677 = vld [vmem:[#allocation5 + $0x68] sm:$0xff]
        %v678 = vld [vmem:[#allocation5 + $0x70] sm:$0xff]
        %v679 = vld [vmem:[#allocation5 + $0x78] sm:$0xff]
        %v680 = vld [vmem:[#allocation5 + $0x80] sm:$0xff]
        %v681 = vld [vmem:[#allocation5 + $0x88] sm:$0xff]
        %v682 = vld [vmem:[#allocation5 + $0x90] sm:$0xff]
        %v683 = vld [vmem:[#allocation5 + $0x98] sm:$0xff]
        %v684 = vld [vmem:[#allocation5 + $0xa0] sm:$0xff]
        %v685 = vld [vmem:[#allocation5 + $0xa8] sm:$0xff]
        %v686 = vld [vmem:[#allocation5 + $0xb0] sm:$0xff]
        %v687 = vld [vmem:[#allocation5 + $0xb8] sm:$0xff]
        %v688 = vld [vmem:[#allocation5 + $0xc0] sm:$0xff]
        %v689 = vld [vmem:[#allocation5 + $0xc8] sm:$0xff]
        %v690 = vld [vmem:[#allocation5 + $0xd0] sm:$0xff]
        %v691 = vld [vmem:[#allocation5 + $0xd8] sm:$0xff]
        %v692 = vld [vmem:[#allocation5 + $0xe0] sm:$0xff]
        %v693 = vld [vmem:[#allocation5 + $0xe8] sm:$0xff]
        %v694 = vld [vmem:[#allocation5 + $0xf0] sm:$0xff]
        %v695 = vld [vmem:[#allocation5 + $0xf8] sm:$0xff]
        %v696 = vld [vmem:[#allocation5 + $0x100] sm:$0xff]
        %v697 = vld [vmem:[#allocation5 + $0x108] sm:$0xff]
        %v698 = vld [vmem:[#allocation5 + $0x110] sm:$0xff]
        %v699 = vld [vmem:[#allocation5 + $0x118] sm:$0xff]
        %v700 = vld [vmem:[#allocation5 + $0x120] sm:$0xff]
        %v701 = vld [vmem:[#allocation5 + $0x128] sm:$0xff]
        %v702 = vld [vmem:[#allocation5 + $0x130] sm:$0xff]
        %v703 = vld [vmem:[#allocation5 + $0x138] sm:$0xff]
        %v704 = vld [vmem:[#allocation5 + $0x140] sm:$0xff]
        %v705 = vld [vmem:[#allocation5 + $0x148] sm:$0xff]
        %v706 = vld [vmem:[#allocation5 + $0x150] sm:$0xff]
        %v707 = vld [vmem:[#allocation5 + $0x158] sm:$0xff]
        %v708 = vld [vmem:[#allocation5 + $0x160] sm:$0xff]
        %v709 = vld [vmem:[#allocation5 + $0x168] sm:$0xff]
        %v710 = vld [vmem:[#allocation5 + $0x170] sm:$0xff]
        %v711 = vld [vmem:[#allocation5 + $0x178] sm:$0xff]
        %v712 = vld [vmem:[#allocation7] sm:$0x3]
        %v714 = vlaneseq
        %v715 = vshrl.u32 %v714, 7
        %v716 = vsub.s32 0, %v715
        %v717 = vrot.slane %v712, %v716
        %v718 = vlaneseq
        %v719 = vshrl.u32 %v718, 7
        %v720 = vsub.s32 1, %v719
        %v721 = vrot.slane %v712, %v720
        %v772 = vunpack.c.l.b16 %v664
        %v773 = vunpack.c.h.b16 %v664
        %v774 = vunpack.c.l.b16 %v665
        %v775 = vunpack.c.h.b16 %v665
        %v776 = vunpack.c.l.b16 %v666
        %v777 = vunpack.c.h.b16 %v666
        %v778 = vunpack.c.l.b16 %v667
        %v779 = vunpack.c.h.b16 %v667
        %v780 = vunpack.c.l.b16 %v668
        %v781 = vunpack.c.h.b16 %v668
        %v782 = vunpack.c.l.b16 %v669
        %v783 = vunpack.c.h.b16 %v669
        %v784 = vunpack.c.l.b16 %v670
        %v785 = vunpack.c.h.b16 %v670
        %v786 = vunpack.c.l.b16 %v671
        %v787 = vunpack.c.h.b16 %v671
        %v788 = vunpack.c.l.b16 %v672
        %v789 = vunpack.c.h.b16 %v672
        %v790 = vunpack.c.l.b16 %v673
        %v791 = vunpack.c.h.b16 %v673
        %v792 = vunpack.c.l.b16 %v674
        %v793 = vunpack.c.h.b16 %v674
        %v794 = vunpack.c.l.b16 %v675
        %v795 = vunpack.c.h.b16 %v675
        %v796 = vunpack.c.l.b16 %v676
        %v797 = vunpack.c.h.b16 %v676
        %v798 = vunpack.c.l.b16 %v677
        %v799 = vunpack.c.h.b16 %v677
        %v800 = vunpack.c.l.b16 %v678
        %v801 = vunpack.c.h.b16 %v678
        %v802 = vunpack.c.l.b16 %v679
        %v803 = vunpack.c.h.b16 %v679
        %v804 = vunpack.c.l.b16 %v680
        %v805 = vunpack.c.h.b16 %v680
        %v806 = vunpack.c.l.b16 %v681
        %v807 = vunpack.c.h.b16 %v681
        %v808 = vunpack.c.l.b16 %v682
        %v809 = vunpack.c.h.b16 %v682
        %v810 = vunpack.c.l.b16 %v683
        %v811 = vunpack.c.h.b16 %v683
        %v812 = vunpack.c.l.b16 %v684
        %v813 = vunpack.c.h.b16 %v684
        %v814 = vunpack.c.l.b16 %v685
        %v815 = vunpack.c.h.b16 %v685
        %v816 = vunpack.c.l.b16 %v686
        %v817 = vunpack.c.h.b16 %v686
        %v818 = vunpack.c.l.b16 %v687
        %v819 = vunpack.c.h.b16 %v687
        %v820 = vunpack.c.l.b16 %v688
        %v821 = vunpack.c.h.b16 %v688
        %v822 = vunpack.c.l.b16 %v689
        %v823 = vunpack.c.h.b16 %v689
        %v824 = vunpack.c.l.b16 %v690
        %v825 = vunpack.c.h.b16 %v690
        %v826 = vunpack.c.l.b16 %v691
        %v827 = vunpack.c.h.b16 %v691
        %v828 = vunpack.c.l.b16 %v692
        %v829 = vunpack.c.h.b16 %v692
        %v830 = vunpack.c.l.b16 %v693
        %v831 = vunpack.c.h.b16 %v693
        %v832 = vunpack.c.l.b16 %v694
        %v833 = vunpack.c.h.b16 %v694
        %v834 = vunpack.c.l.b16 %v695
        %v835 = vunpack.c.h.b16 %v695
        %v836 = vunpack.c.l.b16 %v696
        %v837 = vunpack.c.h.b16 %v696
        %v838 = vunpack.c.l.b16 %v697
        %v839 = vunpack.c.h.b16 %v697
        %v840 = vunpack.c.l.b16 %v698
        %v841 = vunpack.c.h.b16 %v698
        %v842 = vunpack.c.l.b16 %v699
        %v843 = vunpack.c.h.b16 %v699
        %v844 = vunpack.c.l.b16 %v700
        %v845 = vunpack.c.h.b16 %v700
        %v846 = vunpack.c.l.b16 %v701
        %v847 = vunpack.c.h.b16 %v701
        %v848 = vunpack.c.l.b16 %v702
        %v849 = vunpack.c.h.b16 %v702
        %v850 = vunpack.c.l.b16 %v703
        %v851 = vunpack.c.h.b16 %v703
        %v852 = vunpack.c.l.b16 %v704
        %v853 = vunpack.c.h.b16 %v704
        %v854 = vunpack.c.l.b16 %v705
        %v855 = vunpack.c.h.b16 %v705
        %v856 = vunpack.c.l.b16 %v706
        %v857 = vunpack.c.h.b16 %v706
        %v858 = vunpack.c.l.b16 %v707
        %v859 = vunpack.c.h.b16 %v707
        %v860 = vunpack.c.l.b16 %v708
        %v861 = vunpack.c.h.b16 %v708
        %v862 = vunpack.c.l.b16 %v709
        %v863 = vunpack.c.h.b16 %v709
        %v864 = vunpack.c.l.b16 %v710
        %v865 = vunpack.c.h.b16 %v710
        %v866 = vunpack.c.l.b16 %v711
        %v867 = vunpack.c.h.b16 %v711
        %v868 = vpack.c.b16 %v774, %v772
        %v869 = vpack.c.b16 %v775, %v773
        %v870 = vpack.c.b16 %v778, %v776
        %v871 = vpack.c.b16 %v779, %v777
        %v872 = vpack.c.b16 %v782, %v780
        %v873 = vpack.c.b16 %v783, %v781
        %v874 = vpack.c.b16 %v786, %v784
        %v875 = vpack.c.b16 %v787, %v785
        %v876 = vpack.c.b16 %v790, %v788
        %v877 = vpack.c.b16 %v791, %v789
        %v878 = vpack.c.b16 %v794, %v792
        %v879 = vpack.c.b16 %v795, %v793
        %v880 = vpack.c.b16 %v798, %v796
        %v881 = vpack.c.b16 %v799, %v797
        %v882 = vpack.c.b16 %v802, %v800
        %v883 = vpack.c.b16 %v803, %v801
        %v884 = vpack.c.b16 %v806, %v804
        %v885 = vpack.c.b16 %v807, %v805
        %v886 = vpack.c.b16 %v810, %v808
        %v887 = vpack.c.b16 %v811, %v809
        %v888 = vpack.c.b16 %v814, %v812
        %v889 = vpack.c.b16 %v815, %v813
        %v890 = vpack.c.b16 %v818, %v816
        %v891 = vpack.c.b16 %v819, %v817
        %v892 = vpack.c.b16 %v822, %v820
        %v893 = vpack.c.b16 %v823, %v821
        %v894 = vpack.c.b16 %v826, %v824
        %v895 = vpack.c.b16 %v827, %v825
        %v896 = vpack.c.b16 %v830, %v828
        %v897 = vpack.c.b16 %v831, %v829
        %v898 = vpack.c.b16 %v834, %v832
        %v899 = vpack.c.b16 %v835, %v833
        %v900 = vpack.c.b16 %v838, %v836
        %v901 = vpack.c.b16 %v839, %v837
        %v902 = vpack.c.b16 %v842, %v840
        %v903 = vpack.c.b16 %v843, %v841
        %v904 = vpack.c.b16 %v846, %v844
        %v905 = vpack.c.b16 %v847, %v845
        %v906 = vpack.c.b16 %v850, %v848
        %v907 = vpack.c.b16 %v851, %v849
        %v908 = vpack.c.b16 %v854, %v852
        %v909 = vpack.c.b16 %v855, %v853
        %v910 = vpack.c.b16 %v858, %v856
        %v911 = vpack.c.b16 %v859, %v857
        %v912 = vpack.c.b16 %v862, %v860
        %v913 = vpack.c.b16 %v863, %v861
        %v914 = vpack.c.b16 %v866, %v864
        %v915 = vpack.c.b16 %v867, %v865
        %964 = vmatprep.subr.bf16.mxu0 %v869
        %965 = vmatpush1.bf16.msra.mxu0 %v868
        %966 = vmatprep.subr.bf16.mxu0 %v871
        %967 = vmatpush1.bf16.msra.mxu0 %v870
        %968 = vmatprep.subr.bf16.mxu0 %v873
        %969 = vmatpush1.bf16.msra.mxu0 %v872
        %970 = vmatprep.subr.bf16.mxu0 %v875
        %971 = vmatpush1.bf16.msra.mxu0 %v874
        %972 = vmatprep.subr.bf16.mxu0 %v877
        %973 = vmatpush1.bf16.msra.mxu0 %v876
        %974 = vmatprep.subr.bf16.mxu0 %v879
        %975 = vmatpush1.bf16.msra.mxu0 %v878
        %976 = vmatprep.subr.bf16.mxu0 %v881
        %977 = vmatpush1.bf16.msra.mxu0 %v880
        %978 = vmatprep.subr.bf16.mxu0 %v883
        %979 = vmatpush1.bf16.msra.mxu0 %v882
        %980 = vmatprep.subr.bf16.mxu0 %v885
        %981 = vmatpush1.bf16.msra.mxu0 %v884
        %982 = vmatprep.subr.bf16.mxu0 %v887
        %983 = vmatpush1.bf16.msra.mxu0 %v886
        %984 = vmatprep.subr.bf16.mxu0 %v889
        %985 = vmatpush1.bf16.msra.mxu0 %v888
        %986 = vmatprep.subr.bf16.mxu0 %v891
        %987 = vmatpush1.bf16.msra.mxu0 %v890
        %988 = vmatprep.subr.bf16.mxu0 %v893
        %989 = vmatpush1.bf16.msra.mxu0 %v892
        %990 = vmatprep.subr.bf16.mxu0 %v895
        %991 = vmatpush1.bf16.msra.mxu0 %v894
        %992 = vmatprep.subr.bf16.mxu0 %v897
        %993 = vmatpush1.bf16.msra.mxu0 %v896
        %994 = vmatprep.subr.bf16.mxu0 %v899
        %995 = vmatpush1.bf16.msra.mxu0 %v898
        %996 = vmatprep.mubr.bf16.mxu0 %v659
        %997 = vmatmul.mubr.bf16.gmra.mrb[0].mxu0 %v658
        %v998 = vpop.f32.mrb[0].mxu0
        %v999 = vadd.f32 %v717, %v998
        %v1000 = vpop.f32.mrb[0].mxu0
        %v1001 = vadd.f32 %v721, %v1000
        %v1002 = vpop.f32.mrb[0].mxu0
        %v1003 = vadd.f32 %v717, %v1002
        %v1004 = vpop.f32.mrb[0].mxu0
        %v1005 = vadd.f32 %v721, %v1004
        %1006 = vmatprep.mubr.bf16.mxu0 %v662
        %1007 = vmatmul.mubr.bf16.gmra.mrb[0].mxu0 %v661
        %v1008 = vpop.f32.mrb[0].mxu0
        %v1009 = vadd.f32 %v717, %v1008
        %v1010 = vpop.f32.mrb[0].mxu0
        %v1011 = vadd.f32 %v721, %v1010
        %v1012 = vpop.f32.mrb[0].mxu0
        %v1013 = vadd.f32 %v717, %v1012
        %v1014 = vpop.f32.mrb[0].mxu0
        %v1015 = vadd.f32 %v721, %v1014
        %1016 = vdwg.mxu0
        %1017 = vmatprep.subr.bf16.mxu0 %v901
        %1018 = vmatpush1.bf16.msra.mxu0 %v900
        %1019 = vmatprep.subr.bf16.mxu0 %v903
        %1020 = vmatpush1.bf16.msra.mxu0 %v902
        %1021 = vmatprep.subr.bf16.mxu0 %v905
        %1022 = vmatpush1.bf16.msra.mxu0 %v904
        %1023 = vmatprep.subr.bf16.mxu0 %v907
        %1024 = vmatpush1.bf16.msra.mxu0 %v906
        %1025 = vmatprep.subr.bf16.mxu0 %v909
        %1026 = vmatpush1.bf16.msra.mxu0 %v908
        %1027 = vmatprep.subr.bf16.mxu0 %v911
        %1028 = vmatpush1.bf16.msra.mxu0 %v910
        %1029 = vmatprep.subr.bf16.mxu0 %v913
        %1030 = vmatpush1.bf16.msra.mxu0 %v912
        %1031 = vmatprep.subr.bf16.mxu0 %v915
        %1032 = vmatpush1.bf16.msra.mxu0 %v914
        %1033 = vmatprep.subr.bf16.mxu0 0
        %1034 = vmatpush1.bf16.msra.mxu0 0
        %1035 = vmatprep.subr.bf16.mxu0 0
        %1036 = vmatpush1.bf16.msra.mxu0 0
        %1037 = vmatprep.subr.bf16.mxu0 0
        %1038 = vmatpush1.bf16.msra.mxu0 0
        %1039 = vmatprep.subr.bf16.mxu0 0
        %1040 = vmatpush1.bf16.msra.mxu0 0
        %1041 = vmatprep.subr.bf16.mxu0 0
        %1042 = vmatpush1.bf16.msra.mxu0 0
        %1043 = vmatprep.subr.bf16.mxu0 0
        %1044 = vmatpush1.bf16.msra.mxu0 0
        %1045 = vmatprep.subr.bf16.mxu0 0
        %1046 = vmatpush1.bf16.msra.mxu0 0
        %1047 = vmatprep.subr.bf16.mxu0 0
        %1048 = vmatpush1.bf16.msra.mxu0 0
        %1049 = vmatprep.mubr.bf16.mxu0 0
        %1050 = vmatmul.mubr.bf16.gmra.mrb[0].mxu0 %v660
        %v1051 = vpop.f32.mrb[0].mxu0
        %v1052 = vadd.f32 %v999, %v1051
        %v1053 = vpop.f32.mrb[0].mxu0
        %v1054 = vadd.f32 %v1001, %v1053
        %v1055 = vpop.f32.mrb[0].mxu0
        %v1056 = vadd.f32 %v1003, %v1055
        %v1057 = vpop.f32.mrb[0].mxu0
        %v1058 = vadd.f32 %v1005, %v1057
        %1059 = vmatprep.mubr.bf16.mxu0 0
        %1060 = vmatmul.mubr.bf16.gmra.mrb[0].mxu0 %v663
        %v1061 = vpop.f32.mrb[0].mxu0
        %v1062 = vadd.f32 %v1009, %v1061
        %v1063 = vpop.f32.mrb[0].mxu0
        %v1064 = vadd.f32 %v1011, %v1063
        %v1065 = vpop.f32.mrb[0].mxu0
        %v1066 = vadd.f32 %v1013, %v1065
        %v1067 = vpop.f32.mrb[0].mxu0
        %v1068 = vadd.f32 %v1015, %v1067
        %1069 = vdwg.mxu0
        %v1070 = vmax.f32 %v1052, 0.0
        %v1071 = vmax.f32 %v1054, 0.0
        %v1072 = vmax.f32 %v1056, 0.0
        %v1073 = vmax.f32 %v1058, 0.0
        %v1074 = vmax.f32 %v1062, 0.0
        %v1075 = vmax.f32 %v1064, 0.0
        %v1076 = vmax.f32 %v1066, 0.0
        %v1077 = vmax.f32 %v1068, 0.0
        %v1086 = vrot.slane %v1070, 7
        %v1087 = vrot.slane %v1071, 7
        %v1088 = vrot.slane %v1072, 7
        %v1089 = vsel %vm608, %v1086, %v1088
        %v1090 = vrot.slane %v1073, 7
        %v1091 = vsel %vm608, %v1087, %v1090
        %v1092 = vrot.slane %v1074, 7
        %v1093 = vsel %vm608, %v1088, %v1092
        %v1094 = vrot.slane %v1075, 7
        %v1095 = vsel %vm608, %v1090, %v1094
        %v1096 = vrot.slane %v1076, 7
        %v1097 = vsel %vm608, %v1092, %v1096
        %v1098 = vrot.slane %v1077, 7
        %v1099 = vsel %vm608, %v1094, %v1098
        %v1108 = vsel %vm608, 0.0, %v1086
        %v1109 = vsel %vm608, 0.0, %v1087
        %v1110 = vrot.slane %v1070, 1
        %v1111 = vrot.slane %v1072, 1
        %v1112 = vsel %vm621, %v1110, %v1111
        %v1113 = vrot.slane %v1071, 1
        %v1114 = vrot.slane %v1073, 1
        %v1115 = vsel %vm621, %v1113, %v1114
        %v1116 = vrot.slane %v1074, 1
        %v1117 = vsel %vm621, %v1111, %v1116
        %v1118 = vrot.slane %v1075, 1
        %v1119 = vsel %vm621, %v1114, %v1118
        %v1120 = vrot.slane %v1076, 1
        %v1121 = vsel %vm621, %v1116, %v1120
        %v1122 = vrot.slane %v1077, 1
        %v1123 = vsel %vm621, %v1118, %v1122
        %v1132 = vsel %vm621, %v1120, 0.0
        %v1133 = vsel %vm621, %v1122, 0.0
        %v1134 = vsel %vm638, %v1108, 0.0
        %v1135 = vsel %vm638, %v1109, 0.0
        %v1136 = vsel %vm639, %v1089, 0.0
        %v1137 = vsel %vm639, %v1091, 0.0
        %v1138 = vsel %vm640, %v1093, 0.0
        %v1139 = vsel %vm640, %v1095, 0.0
        %v1140 = vsel %vm641, %v1097, 0.0
        %v1141 = vsel %vm641, %v1099, 0.0
        %v1142 = vsel %vm650, %v1112, 0.0
        %v1143 = vsel %vm650, %v1115, 0.0
        %v1144 = vsel %vm651, %v1117, 0.0
        %v1145 = vsel %vm651, %v1119, 0.0
        %v1146 = vsel %vm652, %v1121, 0.0
        %v1147 = vsel %vm652, %v1123, 0.0
        %v1148 = vsel %vm653, %v1132, 0.0
        %v1149 = vsel %vm653, %v1133, 0.0
        %v1150 = vpack.c.bf16 %v1136, %v1134
        %v1151 = vpack.c.bf16 %v1137, %v1135
        %v1152 = vpack.c.bf16 %v1072, %v1070
        %v1153 = vpack.c.bf16 %v1073, %v1071
        %v1154 = vpack.c.bf16 %v1144, %v1142
        %v1155 = vpack.c.bf16 %v1145, %v1143
        %v1156 = vpack.c.bf16 %v1140, %v1138
        %v1157 = vpack.c.bf16 %v1141, %v1139
        %v1158 = vpack.c.bf16 %v1076, %v1074
        %v1159 = vpack.c.bf16 %v1077, %v1075
        %v1160 = vpack.c.bf16 %v1148, %v1146
        %v1161 = vpack.c.bf16 %v1149, %v1147
        %v1162 = vld [vmem:[#allocation8] sm:$0xff]
        %v1163 = vld [vmem:[#allocation8 + $0x8] sm:$0xff]
        %v1164 = vld [vmem:[#allocation8 + $0x10] sm:$0xff]
        %v1165 = vld [vmem:[#allocation8 + $0x18] sm:$0xff]
        %v1166 = vld [vmem:[#allocation8 + $0x20] sm:$0xff]
        %v1167 = vld [vmem:[#allocation8 + $0x28] sm:$0xff]
        %v1168 = vld [vmem:[#allocation8 + $0x30] sm:$0xff]
        %v1169 = vld [vmem:[#allocation8 + $0x38] sm:$0xff]
        %v1170 = vld [vmem:[#allocation8 + $0x40] sm:$0xff]
        %v1171 = vld [vmem:[#allocation8 + $0x48] sm:$0xff]
        %v1172 = vld [vmem:[#allocation8 + $0x50] sm:$0xff]
        %v1173 = vld [vmem:[#allocation8 + $0x58] sm:$0xff]
        %v1174 = vld [vmem:[#allocation8 + $0x60] sm:$0xff]
        %v1175 = vld [vmem:[#allocation8 + $0x68] sm:$0xff]
        %v1176 = vld [vmem:[#allocation8 + $0x70] sm:$0xff]
        %v1177 = vld [vmem:[#allocation8 + $0x78] sm:$0xff]
        %v1178 = vld [vmem:[#allocation8 + $0x80] sm:$0xff]
        %v1179 = vld [vmem:[#allocation8 + $0x88] sm:$0xff]
        %v1180 = vld [vmem:[#allocation8 + $0x90] sm:$0xff]
        %v1181 = vld [vmem:[#allocation8 + $0x98] sm:$0xff]
        %v1182 = vld [vmem:[#allocation8 + $0xa0] sm:$0xff]
        %v1183 = vld [vmem:[#allocation8 + $0xa8] sm:$0xff]
        %v1184 = vld [vmem:[#allocation8 + $0xb0] sm:$0xff]
        %v1185 = vld [vmem:[#allocation8 + $0xb8] sm:$0xff]
        %v1186 = vld [vmem:[#allocation8 + $0xc0] sm:$0xff]
        %v1187 = vld [vmem:[#allocation8 + $0xc8] sm:$0xff]
        %v1188 = vld [vmem:[#allocation8 + $0xd0] sm:$0xff]
        %v1189 = vld [vmem:[#allocation8 + $0xd8] sm:$0xff]
        %v1190 = vld [vmem:[#allocation8 + $0xe0] sm:$0xff]
        %v1191 = vld [vmem:[#allocation8 + $0xe8] sm:$0xff]
        %v1192 = vld [vmem:[#allocation8 + $0xf0] sm:$0xff]
        %v1193 = vld [vmem:[#allocation8 + $0xf8] sm:$0xff]
        %v1194 = vld [vmem:[#allocation8 + $0x100] sm:$0xff]
        %v1195 = vld [vmem:[#allocation8 + $0x108] sm:$0xff]
        %v1196 = vld [vmem:[#allocation8 + $0x110] sm:$0xff]
        %v1197 = vld [vmem:[#allocation8 + $0x118] sm:$0xff]
        %v1198 = vld [vmem:[#allocation8 + $0x120] sm:$0xff]
        %v1199 = vld [vmem:[#allocation8 + $0x128] sm:$0xff]
        %v1200 = vld [vmem:[#allocation8 + $0x130] sm:$0xff]
        %v1201 = vld [vmem:[#allocation8 + $0x138] sm:$0xff]
        %v1202 = vld [vmem:[#allocation8 + $0x140] sm:$0xff]
        %v1203 = vld [vmem:[#allocation8 + $0x148] sm:$0xff]
        %v1204 = vld [vmem:[#allocation8 + $0x150] sm:$0xff]
        %v1205 = vld [vmem:[#allocation8 + $0x158] sm:$0xff]
        %v1206 = vld [vmem:[#allocation8 + $0x160] sm:$0xff]
        %v1207 = vld [vmem:[#allocation8 + $0x168] sm:$0xff]
        %v1208 = vld [vmem:[#allocation8 + $0x170] sm:$0xff]
        %v1209 = vld [vmem:[#allocation8 + $0x178] sm:$0xff]
        %v1210 = vld [vmem:[#allocation8 + $0x180] sm:$0xff]
        %v1211 = vld [vmem:[#allocation8 + $0x188] sm:$0xff]
        %v1212 = vld [vmem:[#allocation8 + $0x190] sm:$0xff]
        %v1213 = vld [vmem:[#allocation8 + $0x198] sm:$0xff]
        %v1214 = vld [vmem:[#allocation8 + $0x1a0] sm:$0xff]
        %v1215 = vld [vmem:[#allocation8 + $0x1a8] sm:$0xff]
        %v1216 = vld [vmem:[#allocation8 + $0x1b0] sm:$0xff]
        %v1217 = vld [vmem:[#allocation8 + $0x1b8] sm:$0xff]
        %v1218 = vld [vmem:[#allocation8 + $0x1c0] sm:$0xff]
        %v1219 = vld [vmem:[#allocation8 + $0x1c8] sm:$0xff]
        %v1220 = vld [vmem:[#allocation8 + $0x1d0] sm:$0xff]
        %v1221 = vld [vmem:[#allocation8 + $0x1d8] sm:$0xff]
        %v1222 = vld [vmem:[#allocation8 + $0x1e0] sm:$0xff]
        %v1223 = vld [vmem:[#allocation8 + $0x1e8] sm:$0xff]
        %v1224 = vld [vmem:[#allocation8 + $0x1f0] sm:$0xff]
        %v1225 = vld [vmem:[#allocation8 + $0x1f8] sm:$0xff]
        %v1226 = vld [vmem:[#allocation8 + $0x200] sm:$0xff]
        %v1227 = vld [vmem:[#allocation8 + $0x208] sm:$0xff]
        %v1228 = vld [vmem:[#allocation8 + $0x210] sm:$0xff]
        %v1229 = vld [vmem:[#allocation8 + $0x218] sm:$0xff]
        %v1230 = vld [vmem:[#allocation8 + $0x220] sm:$0xff]
        %v1231 = vld [vmem:[#allocation8 + $0x228] sm:$0xff]
        %v1232 = vld [vmem:[#allocation8 + $0x230] sm:$0xff]
        %v1233 = vld [vmem:[#allocation8 + $0x238] sm:$0xff]
        %v1234 = vld [vmem:[#allocation8 + $0x240] sm:$0xff]
        %v1235 = vld [vmem:[#allocation8 + $0x248] sm:$0xff]
        %v1236 = vld [vmem:[#allocation8 + $0x250] sm:$0xff]
        %v1237 = vld [vmem:[#allocation8 + $0x258] sm:$0xff]
        %v1238 = vld [vmem:[#allocation8 + $0x260] sm:$0xff]
        %v1239 = vld [vmem:[#allocation8 + $0x268] sm:$0xff]
        %v1240 = vld [vmem:[#allocation8 + $0x270] sm:$0xff]
        %v1241 = vld [vmem:[#allocation8 + $0x278] sm:$0xff]
        %v1242 = vld [vmem:[#allocation8 + $0x280] sm:$0xff]
        %v1243 = vld [vmem:[#allocation8 + $0x288] sm:$0xff]
        %v1244 = vld [vmem:[#allocation8 + $0x290] sm:$0xff]
        %v1245 = vld [vmem:[#allocation8 + $0x298] sm:$0xff]
        %v1246 = vld [vmem:[#allocation8 + $0x2a0] sm:$0xff]
        %v1247 = vld [vmem:[#allocation8 + $0x2a8] sm:$0xff]
        %v1248 = vld [vmem:[#allocation8 + $0x2b0] sm:$0xff]
        %v1249 = vld [vmem:[#allocation8 + $0x2b8] sm:$0xff]
        %v1250 = vld [vmem:[#allocation8 + $0x2c0] sm:$0xff]
        %v1251 = vld [vmem:[#allocation8 + $0x2c8] sm:$0xff]
        %v1252 = vld [vmem:[#allocation8 + $0x2d0] sm:$0xff]
        %v1253 = vld [vmem:[#allocation8 + $0x2d8] sm:$0xff]
        %v1254 = vld [vmem:[#allocation8 + $0x2e0] sm:$0xff]
        %v1255 = vld [vmem:[#allocation8 + $0x2e8] sm:$0xff]
        %v1256 = vld [vmem:[#allocation8 + $0x2f0] sm:$0xff]
        %v1257 = vld [vmem:[#allocation8 + $0x2f8] sm:$0xff]
        %v1258 = vld [vmem:[#allocation10] sm:$0x3]
        %v1260 = vlaneseq
        %v1261 = vshrl.u32 %v1260, 7
        %v1262 = vsub.s32 0, %v1261
        %v1263 = vrot.slane %v1258, %v1262
        %v1264 = vlaneseq
        %v1265 = vshrl.u32 %v1264, 7
        %v1266 = vsub.s32 1, %v1265
        %v1267 = vrot.slane %v1258, %v1266
        %v1366 = vunpack.c.l.b16 %v1162
        %v1367 = vunpack.c.h.b16 %v1162
        %v1368 = vunpack.c.l.b16 %v1163
        %v1369 = vunpack.c.h.b16 %v1163
        %v1370 = vunpack.c.l.b16 %v1164
        %v1371 = vunpack.c.h.b16 %v1164
        %v1372 = vunpack.c.l.b16 %v1165
        %v1373 = vunpack.c.h.b16 %v1165
        %v1374 = vunpack.c.l.b16 %v1166
        %v1375 = vunpack.c.h.b16 %v1166
        %v1376 = vunpack.c.l.b16 %v1167
        %v1377 = vunpack.c.h.b16 %v1167
        %v1378 = vunpack.c.l.b16 %v1168
        %v1379 = vunpack.c.h.b16 %v1168
        %v1380 = vunpack.c.l.b16 %v1169
        %v1381 = vunpack.c.h.b16 %v1169
        %v1382 = vunpack.c.l.b16 %v1170
        %v1383 = vunpack.c.h.b16 %v1170
        %v1384 = vunpack.c.l.b16 %v1171
        %v1385 = vunpack.c.h.b16 %v1171
        %v1386 = vunpack.c.l.b16 %v1172
        %v1387 = vunpack.c.h.b16 %v1172
        %v1388 = vunpack.c.l.b16 %v1173
        %v1389 = vunpack.c.h.b16 %v1173
        %v1390 = vunpack.c.l.b16 %v1174
        %v1391 = vunpack.c.h.b16 %v1174
        %v1392 = vunpack.c.l.b16 %v1175
        %v1393 = vunpack.c.h.b16 %v1175
        %v1394 = vunpack.c.l.b16 %v1176
        %v1395 = vunpack.c.h.b16 %v1176
        %v1396 = vunpack.c.l.b16 %v1177
        %v1397 = vunpack.c.h.b16 %v1177
        %v1398 = vunpack.c.l.b16 %v1178
        %v1399 = vunpack.c.h.b16 %v1178
        %v1400 = vunpack.c.l.b16 %v1179
        %v1401 = vunpack.c.h.b16 %v1179
        %v1402 = vunpack.c.l.b16 %v1180
        %v1403 = vunpack.c.h.b16 %v1180
        %v1404 = vunpack.c.l.b16 %v1181
        %v1405 = vunpack.c.h.b16 %v1181
        %v1406 = vunpack.c.l.b16 %v1182
        %v1407 = vunpack.c.h.b16 %v1182
        %v1408 = vunpack.c.l.b16 %v1183
        %v1409 = vunpack.c.h.b16 %v1183
        %v1410 = vunpack.c.l.b16 %v1184
        %v1411 = vunpack.c.h.b16 %v1184
        %v1412 = vunpack.c.l.b16 %v1185
        %v1413 = vunpack.c.h.b16 %v1185
        %v1414 = vunpack.c.l.b16 %v1186
        %v1415 = vunpack.c.h.b16 %v1186
        %v1416 = vunpack.c.l.b16 %v1187
        %v1417 = vunpack.c.h.b16 %v1187
        %v1418 = vunpack.c.l.b16 %v1188
        %v1419 = vunpack.c.h.b16 %v1188
        %v1420 = vunpack.c.l.b16 %v1189
        %v1421 = vunpack.c.h.b16 %v1189
        %v1422 = vunpack.c.l.b16 %v1190
        %v1423 = vunpack.c.h.b16 %v1190
        %v1424 = vunpack.c.l.b16 %v1191
        %v1425 = vunpack.c.h.b16 %v1191
        %v1426 = vunpack.c.l.b16 %v1192
        %v1427 = vunpack.c.h.b16 %v1192
        %v1428 = vunpack.c.l.b16 %v1193
        %v1429 = vunpack.c.h.b16 %v1193
        %v1430 = vunpack.c.l.b16 %v1194
        %v1431 = vunpack.c.h.b16 %v1194
        %v1432 = vunpack.c.l.b16 %v1195
        %v1433 = vunpack.c.h.b16 %v1195
        %v1434 = vunpack.c.l.b16 %v1196
        %v1435 = vunpack.c.h.b16 %v1196
        %v1436 = vunpack.c.l.b16 %v1197
        %v1437 = vunpack.c.h.b16 %v1197
        %v1438 = vunpack.c.l.b16 %v1198
        %v1439 = vunpack.c.h.b16 %v1198
        %v1440 = vunpack.c.l.b16 %v1199
        %v1441 = vunpack.c.h.b16 %v1199
        %v1442 = vunpack.c.l.b16 %v1200
        %v1443 = vunpack.c.h.b16 %v1200
        %v1444 = vunpack.c.l.b16 %v1201
        %v1445 = vunpack.c.h.b16 %v1201
        %v1446 = vunpack.c.l.b16 %v1202
        %v1447 = vunpack.c.h.b16 %v1202
        %v1448 = vunpack.c.l.b16 %v1203
        %v1449 = vunpack.c.h.b16 %v1203
        %v1450 = vunpack.c.l.b16 %v1204
        %v1451 = vunpack.c.h.b16 %v1204
        %v1452 = vunpack.c.l.b16 %v1205
        %v1453 = vunpack.c.h.b16 %v1205
        %v1454 = vunpack.c.l.b16 %v1206
        %v1455 = vunpack.c.h.b16 %v1206
        %v1456 = vunpack.c.l.b16 %v1207
        %v1457 = vunpack.c.h.b16 %v1207
        %v1458 = vunpack.c.l.b16 %v1208
        %v1459 = vunpack.c.h.b16 %v1208
        %v1460 = vunpack.c.l.b16 %v1209
        %v1461 = vunpack.c.h.b16 %v1209
        %v1462 = vunpack.c.l.b16 %v1210
        %v1463 = vunpack.c.h.b16 %v1210
        %v1464 = vunpack.c.l.b16 %v1211
        %v1465 = vunpack.c.h.b16 %v1211
        %v1466 = vunpack.c.l.b16 %v1212
        %v1467 = vunpack.c.h.b16 %v1212
        %v1468 = vunpack.c.l.b16 %v1213
        %v1469 = vunpack.c.h.b16 %v1213
        %v1470 = vunpack.c.l.b16 %v1214
        %v1471 = vunpack.c.h.b16 %v1214
        %v1472 = vunpack.c.l.b16 %v1215
        %v1473 = vunpack.c.h.b16 %v1215
        %v1474 = vunpack.c.l.b16 %v1216
        %v1475 = vunpack.c.h.b16 %v1216
        %v1476 = vunpack.c.l.b16 %v1217
        %v1477 = vunpack.c.h.b16 %v1217
        %v1478 = vunpack.c.l.b16 %v1218
        %v1479 = vunpack.c.h.b16 %v1218
        %v1480 = vunpack.c.l.b16 %v1219
        %v1481 = vunpack.c.h.b16 %v1219
        %v1482 = vunpack.c.l.b16 %v1220
        %v1483 = vunpack.c.h.b16 %v1220
        %v1484 = vunpack.c.l.b16 %v1221
        %v1485 = vunpack.c.h.b16 %v1221
        %v1486 = vunpack.c.l.b16 %v1222
        %v1487 = vunpack.c.h.b16 %v1222
        %v1488 = vunpack.c.l.b16 %v1223
        %v1489 = vunpack.c.h.b16 %v1223
        %v1490 = vunpack.c.l.b16 %v1224
        %v1491 = vunpack.c.h.b16 %v1224
        %v1492 = vunpack.c.l.b16 %v1225
        %v1493 = vunpack.c.h.b16 %v1225
        %v1494 = vunpack.c.l.b16 %v1226
        %v1495 = vunpack.c.h.b16 %v1226
        %v1496 = vunpack.c.l.b16 %v1227
        %v1497 = vunpack.c.h.b16 %v1227
        %v1498 = vunpack.c.l.b16 %v1228
        %v1499 = vunpack.c.h.b16 %v1228
        %v1500 = vunpack.c.l.b16 %v1229
        %v1501 = vunpack.c.h.b16 %v1229
        %v1502 = vunpack.c.l.b16 %v1230
        %v1503 = vunpack.c.h.b16 %v1230
        %v1504 = vunpack.c.l.b16 %v1231
        %v1505 = vunpack.c.h.b16 %v1231
        %v1506 = vunpack.c.l.b16 %v1232
        %v1507 = vunpack.c.h.b16 %v1232
        %v1508 = vunpack.c.l.b16 %v1233
        %v1509 = vunpack.c.h.b16 %v1233
        %v1510 = vunpack.c.l.b16 %v1234
        %v1511 = vunpack.c.h.b16 %v1234
        %v1512 = vunpack.c.l.b16 %v1235
        %v1513 = vunpack.c.h.b16 %v1235
        %v1514 = vunpack.c.l.b16 %v1236
        %v1515 = vunpack.c.h.b16 %v1236
        %v1516 = vunpack.c.l.b16 %v1237
        %v1517 = vunpack.c.h.b16 %v1237
        %v1518 = vunpack.c.l.b16 %v1238
        %v1519 = vunpack.c.h.b16 %v1238
        %v1520 = vunpack.c.l.b16 %v1239
        %v1521 = vunpack.c.h.b16 %v1239
        %v1522 = vunpack.c.l.b16 %v1240
        %v1523 = vunpack.c.h.b16 %v1240
        %v1524 = vunpack.c.l.b16 %v1241
        %v1525 = vunpack.c.h.b16 %v1241
        %v1526 = vunpack.c.l.b16 %v1242
        %v1527 = vunpack.c.h.b16 %v1242
        %v1528 = vunpack.c.l.b16 %v1243
        %v1529 = vunpack.c.h.b16 %v1243
        %v1530 = vunpack.c.l.b16 %v1244
        %v1531 = vunpack.c.h.b16 %v1244
        %v1532 = vunpack.c.l.b16 %v1245
        %v1533 = vunpack.c.h.b16 %v1245
        %v1534 = vunpack.c.l.b16 %v1246
        %v1535 = vunpack.c.h.b16 %v1246
        %v1536 = vunpack.c.l.b16 %v1247
        %v1537 = vunpack.c.h.b16 %v1247
        %v1538 = vunpack.c.l.b16 %v1248
        %v1539 = vunpack.c.h.b16 %v1248
        %v1540 = vunpack.c.l.b16 %v1249
        %v1541 = vunpack.c.h.b16 %v1249
        %v1542 = vunpack.c.l.b16 %v1250
        %v1543 = vunpack.c.h.b16 %v1250
        %v1544 = vunpack.c.l.b16 %v1251
        %v1545 = vunpack.c.h.b16 %v1251
        %v1546 = vunpack.c.l.b16 %v1252
        %v1547 = vunpack.c.h.b16 %v1252
        %v1548 = vunpack.c.l.b16 %v1253
        %v1549 = vunpack.c.h.b16 %v1253
        %v1550 = vunpack.c.l.b16 %v1254
        %v1551 = vunpack.c.h.b16 %v1254
        %v1552 = vunpack.c.l.b16 %v1255
        %v1553 = vunpack.c.h.b16 %v1255
        %v1554 = vunpack.c.l.b16 %v1256
        %v1555 = vunpack.c.h.b16 %v1256
        %v1556 = vunpack.c.l.b16 %v1257
        %v1557 = vunpack.c.h.b16 %v1257
        %v1558 = vpack.c.b16 %v1368, %v1366
        %v1559 = vpack.c.b16 %v1369, %v1367
        %v1560 = vpack.c.b16 %v1372, %v1370
        %v1561 = vpack.c.b16 %v1373, %v1371
        %v1562 = vpack.c.b16 %v1376, %v1374
        %v1563 = vpack.c.b16 %v1377, %v1375
        %v1564 = vpack.c.b16 %v1380, %v1378
        %v1565 = vpack.c.b16 %v1381, %v1379
        %v1566 = vpack.c.b16 %v1384, %v1382
        %v1567 = vpack.c.b16 %v1385, %v1383
        %v1568 = vpack.c.b16 %v1388, %v1386
        %v1569 = vpack.c.b16 %v1389, %v1387
        %v1570 = vpack.c.b16 %v1392, %v1390
        %v1571 = vpack.c.b16 %v1393, %v1391
        %v1572 = vpack.c.b16 %v1396, %v1394
        %v1573 = vpack.c.b16 %v1397, %v1395
        %v1574 = vpack.c.b16 %v1400, %v1398
        %v1575 = vpack.c.b16 %v1401, %v1399
        %v1576 = vpack.c.b16 %v1404, %v1402
        %v1577 = vpack.c.b16 %v1405, %v1403
        %v1578 = vpack.c.b16 %v1408, %v1406
        %v1579 = vpack.c.b16 %v1409, %v1407
        %v1580 = vpack.c.b16 %v1412, %v1410
        %v1581 = vpack.c.b16 %v1413, %v1411
        %v1582 = vpack.c.b16 %v1416, %v1414
        %v1583 = vpack.c.b16 %v1417, %v1415
        %v1584 = vpack.c.b16 %v1420, %v1418
        %v1585 = vpack.c.b16 %v1421, %v1419
        %v1586 = vpack.c.b16 %v1424, %v1422
        %v1587 = vpack.c.b16 %v1425, %v1423
        %v1588 = vpack.c.b16 %v1428, %v1426
        %v1589 = vpack.c.b16 %v1429, %v1427
        %v1590 = vpack.c.b16 %v1432, %v1430
        %v1591 = vpack.c.b16 %v1433, %v1431
        %v1592 = vpack.c.b16 %v1436, %v1434
        %v1593 = vpack.c.b16 %v1437, %v1435
        %v1594 = vpack.c.b16 %v1440, %v1438
        %v1595 = vpack.c.b16 %v1441, %v1439
        %v1596 = vpack.c.b16 %v1444, %v1442
        %v1597 = vpack.c.b16 %v1445, %v1443
        %v1598 = vpack.c.b16 %v1448, %v1446
        %v1599 = vpack.c.b16 %v1449, %v1447
        %v1600 = vpack.c.b16 %v1452, %v1450
        %v1601 = vpack.c.b16 %v1453, %v1451
        %v1602 = vpack.c.b16 %v1456, %v1454
        %v1603 = vpack.c.b16 %v1457, %v1455
        %v1604 = vpack.c.b16 %v1460, %v1458
        %v1605 = vpack.c.b16 %v1461, %v1459
        %v1606 = vpack.c.b16 %v1464, %v1462
        %v1607 = vpack.c.b16 %v1465, %v1463
        %v1608 = vpack.c.b16 %v1468, %v1466
        %v1609 = vpack.c.b16 %v1469, %v1467
        %v1610 = vpack.c.b16 %v1472, %v1470
        %v1611 = vpack.c.b16 %v1473, %v1471
        %v1612 = vpack.c.b16 %v1476, %v1474
        %v1613 = vpack.c.b16 %v1477, %v1475
        %v1614 = vpack.c.b16 %v1480, %v1478
        %v1615 = vpack.c.b16 %v1481, %v1479
        %v1616 = vpack.c.b16 %v1484, %v1482
        %v1617 = vpack.c.b16 %v1485, %v1483
        %v1618 = vpack.c.b16 %v1488, %v1486
        %v1619 = vpack.c.b16 %v1489, %v1487
        %v1620 = vpack.c.b16 %v1492, %v1490
        %v1621 = vpack.c.b16 %v1493, %v1491
        %v1622 = vpack.c.b16 %v1496, %v1494
        %v1623 = vpack.c.b16 %v1497, %v1495
        %v1624 = vpack.c.b16 %v1500, %v1498
        %v1625 = vpack.c.b16 %v1501, %v1499
        %v1626 = vpack.c.b16 %v1504, %v1502
        %v1627 = vpack.c.b16 %v1505, %v1503
        %v1628 = vpack.c.b16 %v1508, %v1506
        %v1629 = vpack.c.b16 %v1509, %v1507
        %v1630 = vpack.c.b16 %v1512, %v1510
        %v1631 = vpack.c.b16 %v1513, %v1511
        %v1632 = vpack.c.b16 %v1516, %v1514
        %v1633 = vpack.c.b16 %v1517, %v1515
        %v1634 = vpack.c.b16 %v1520, %v1518
        %v1635 = vpack.c.b16 %v1521, %v1519
        %v1636 = vpack.c.b16 %v1524, %v1522
        %v1637 = vpack.c.b16 %v1525, %v1523
        %v1638 = vpack.c.b16 %v1528, %v1526
        %v1639 = vpack.c.b16 %v1529, %v1527
        %v1640 = vpack.c.b16 %v1532, %v1530
        %v1641 = vpack.c.b16 %v1533, %v1531
        %v1642 = vpack.c.b16 %v1536, %v1534
        %v1643 = vpack.c.b16 %v1537, %v1535
        %v1644 = vpack.c.b16 %v1540, %v1538
        %v1645 = vpack.c.b16 %v1541, %v1539
        %v1646 = vpack.c.b16 %v1544, %v1542
        %v1647 = vpack.c.b16 %v1545, %v1543
        %v1648 = vpack.c.b16 %v1548, %v1546
        %v1649 = vpack.c.b16 %v1549, %v1547
        %v1650 = vpack.c.b16 %v1552, %v1550
        %v1651 = vpack.c.b16 %v1553, %v1551
        %v1652 = vpack.c.b16 %v1556, %v1554
        %v1653 = vpack.c.b16 %v1557, %v1555
        %1750 = vmatprep.subr.bf16.mxu0 %v1559
        %1751 = vmatpush1.bf16.msra.mxu0 %v1558
        %1752 = vmatprep.subr.bf16.mxu0 %v1561
        %1753 = vmatpush1.bf16.msra.mxu0 %v1560
        %1754 = vmatprep.subr.bf16.mxu0 %v1563
        %1755 = vmatpush1.bf16.msra.mxu0 %v1562
        %1756 = vmatprep.subr.bf16.mxu0 %v1565
        %1757 = vmatpush1.bf16.msra.mxu0 %v1564
        %1758 = vmatprep.subr.bf16.mxu0 %v1567
        %1759 = vmatpush1.bf16.msra.mxu0 %v1566
        %1760 = vmatprep.subr.bf16.mxu0 %v1569
        %1761 = vmatpush1.bf16.msra.mxu0 %v1568
        %1762 = vmatprep.subr.bf16.mxu0 %v1571
        %1763 = vmatpush1.bf16.msra.mxu0 %v1570
        %1764 = vmatprep.subr.bf16.mxu0 %v1573
        %1765 = vmatpush1.bf16.msra.mxu0 %v1572
        %1766 = vmatprep.subr.bf16.mxu0 %v1575
        %1767 = vmatpush1.bf16.msra.mxu0 %v1574
        %1768 = vmatprep.subr.bf16.mxu0 %v1577
        %1769 = vmatpush1.bf16.msra.mxu0 %v1576
        %1770 = vmatprep.subr.bf16.mxu0 %v1579
        %1771 = vmatpush1.bf16.msra.mxu0 %v1578
        %1772 = vmatprep.subr.bf16.mxu0 %v1581
        %1773 = vmatpush1.bf16.msra.mxu0 %v1580
        %1774 = vmatprep.subr.bf16.mxu0 %v1583
        %1775 = vmatpush1.bf16.msra.mxu0 %v1582
        %1776 = vmatprep.subr.bf16.mxu0 %v1585
        %1777 = vmatpush1.bf16.msra.mxu0 %v1584
        %1778 = vmatprep.subr.bf16.mxu0 %v1587
        %1779 = vmatpush1.bf16.msra.mxu0 %v1586
        %1780 = vmatprep.subr.bf16.mxu0 %v1589
        %1781 = vmatpush1.bf16.msra.mxu0 %v1588
        %1782 = vmatprep.mubr.bf16.mxu0 %v1151
        %1783 = vmatmul.mubr.bf16.gmra.mrb[0].mxu0 %v1150
        %v1784 = vpop.f32.mrb[0].mxu0
        %v1785 = vadd.f32 %v1263, %v1784
        %v1786 = vpop.f32.mrb[0].mxu0
        %v1787 = vadd.f32 %v1267, %v1786
        %v1788 = vpop.f32.mrb[0].mxu0
        %v1789 = vadd.f32 %v1263, %v1788
        %v1790 = vpop.f32.mrb[0].mxu0
        %v1791 = vadd.f32 %v1267, %v1790
        %1792 = vmatprep.mubr.bf16.mxu0 %v1157
        %1793 = vmatmul.mubr.bf16.gmra.mrb[0].mxu0 %v1156
        %v1794 = vpop.f32.mrb[0].mxu0
        %v1795 = vadd.f32 %v1263, %v1794
        %v1796 = vpop.f32.mrb[0].mxu0
        %v1797 = vadd.f32 %v1267, %v1796
        %v1798 = vpop.f32.mrb[0].mxu0
        %v1799 = vadd.f32 %v1263, %v1798
        %v1800 = vpop.f32.mrb[0].mxu0
        %v1801 = vadd.f32 %v1267, %v1800
        %1802 = vdwg.mxu0
        %1803 = vmatprep.subr.bf16.mxu0 %v1591
        %1804 = vmatpush1.bf16.msra.mxu0 %v1590
        %1805 = vmatprep.subr.bf16.mxu0 %v1593
        %1806 = vmatpush1.bf16.msra.mxu0 %v1592
        %1807 = vmatprep.subr.bf16.mxu0 %v1595
        %1808 = vmatpush1.bf16.msra.mxu0 %v1594
        %1809 = vmatprep.subr.bf16.mxu0 %v1597
        %1810 = vmatpush1.bf16.msra.mxu0 %v1596
        %1811 = vmatprep.subr.bf16.mxu0 %v1599
        %1812 = vmatpush1.bf16.msra.mxu0 %v1598
        %1813 = vmatprep.subr.bf16.mxu0 %v1601
        %1814 = vmatpush1.bf16.msra.mxu0 %v1600
        %1815 = vmatprep.subr.bf16.mxu0 %v1603
        %1816 = vmatpush1.bf16.msra.mxu0 %v1602
        %1817 = vmatprep.subr.bf16.mxu0 %v1605
        %1818 = vmatpush1.bf16.msra.mxu0 %v1604
        %1819 = vmatprep.subr.bf16.mxu0 %v1607
        %1820 = vmatpush1.bf16.msra.mxu0 %v1606
        %1821 = vmatprep.subr.bf16.mxu0 %v1609
        %1822 = vmatpush1.bf16.msra.mxu0 %v1608
        %1823 = vmatprep.subr.bf16.mxu0 %v1611
        %1824 = vmatpush1.bf16.msra.mxu0 %v1610
        %1825 = vmatprep.subr.bf16.mxu0 %v1613
        %1826 = vmatpush1.bf16.msra.mxu0 %v1612
        %1827 = vmatprep.subr.bf16.mxu0 %v1615
        %1828 = vmatpush1.bf16.msra.mxu0 %v1614
        %1829 = vmatprep.subr.bf16.mxu0 %v1617
        %1830 = vmatpush1.bf16.msra.mxu0 %v1616
        %1831 = vmatprep.subr.bf16.mxu0 %v1619
        %1832 = vmatpush1.bf16.msra.mxu0 %v1618
        %1833 = vmatprep.subr.bf16.mxu0 %v1621
        %1834 = vmatpush1.bf16.msra.mxu0 %v1620
        %1835 = vmatprep.mubr.bf16.mxu0 %v1153
        %1836 = vmatmul.mubr.bf16.gmra.mrb[0].mxu0 %v1152
        %v1837 = vpop.f32.mrb[0].mxu0
        %v1838 = vadd.f32 %v1785, %v1837
        %v1839 = vpop.f32.mrb[0].mxu0
        %v1840 = vadd.f32 %v1787, %v1839
        %v1841 = vpop.f32.mrb[0].mxu0
        %v1842 = vadd.f32 %v1789, %v1841
        %v1843 = vpop.f32.mrb[0].mxu0
        %v1844 = vadd.f32 %v1791, %v1843
        %1845 = vmatprep.mubr.bf16.mxu0 %v1159
        %1846 = vmatmul.mubr.bf16.gmra.mrb[0].mxu0 %v1158
        %v1847 = vpop.f32.mrb[0].mxu0
        %v1848 = vadd.f32 %v1795, %v1847
        %v1849 = vpop.f32.mrb[0].mxu0
        %v1850 = vadd.f32 %v1797, %v1849
        %v1851 = vpop.f32.mrb[0].mxu0
        %v1852 = vadd.f32 %v1799, %v1851
        %v1853 = vpop.f32.mrb[0].mxu0
        %v1854 = vadd.f32 %v1801, %v1853
        %1855 = vdwg.mxu0
        %1856 = vmatprep.subr.bf16.mxu0 %v1623
        %1857 = vmatpush1.bf16.msra.mxu0 %v1622
        %1858 = vmatprep.subr.bf16.mxu0 %v1625
        %1859 = vmatpush1.bf16.msra.mxu0 %v1624
        %1860 = vmatprep.subr.bf16.mxu0 %v1627
        %1861 = vmatpush1.bf16.msra.mxu0 %v1626
        %1862 = vmatprep.subr.bf16.mxu0 %v1629
        %1863 = vmatpush1.bf16.msra.mxu0 %v1628
        %1864 = vmatprep.subr.bf16.mxu0 %v1631
        %1865 = vmatpush1.bf16.msra.mxu0 %v1630
        %1866 = vmatprep.subr.bf16.mxu0 %v1633
        %1867 = vmatpush1.bf16.msra.mxu0 %v1632
        %1868 = vmatprep.subr.bf16.mxu0 %v1635
        %1869 = vmatpush1.bf16.msra.mxu0 %v1634
        %1870 = vmatprep.subr.bf16.mxu0 %v1637
        %1871 = vmatpush1.bf16.msra.mxu0 %v1636
        %1872 = vmatprep.subr.bf16.mxu0 %v1639
        %1873 = vmatpush1.bf16.msra.mxu0 %v1638
        %1874 = vmatprep.subr.bf16.mxu0 %v1641
        %1875 = vmatpush1.bf16.msra.mxu0 %v1640
        %1876 = vmatprep.subr.bf16.mxu0 %v1643
        %1877 = vmatpush1.bf16.msra.mxu0 %v1642
        %1878 = vmatprep.subr.bf16.mxu0 %v1645
        %1879 = vmatpush1.bf16.msra.mxu0 %v1644
        %1880 = vmatprep.subr.bf16.mxu0 %v1647
        %1881 = vmatpush1.bf16.msra.mxu0 %v1646
        %1882 = vmatprep.subr.bf16.mxu0 %v1649
        %1883 = vmatpush1.bf16.msra.mxu0 %v1648
        %1884 = vmatprep.subr.bf16.mxu0 %v1651
        %1885 = vmatpush1.bf16.msra.mxu0 %v1650
        %1886 = vmatprep.subr.bf16.mxu0 %v1653
        %1887 = vmatpush1.bf16.msra.mxu0 %v1652
        %1888 = vmatprep.mubr.bf16.mxu0 %v1155
        %1889 = vmatmul.mubr.bf16.gmra.mrb[0].mxu0 %v1154
        %v1890 = vpop.f32.mrb[0].mxu0
        %v1891 = vadd.f32 %v1838, %v1890
        %v1892 = vpop.f32.mrb[0].mxu0
        %v1893 = vadd.f32 %v1840, %v1892
        %v1894 = vpop.f32.mrb[0].mxu0
        %v1895 = vadd.f32 %v1842, %v1894
        %v1896 = vpop.f32.mrb[0].mxu0
        %v1897 = vadd.f32 %v1844, %v1896
        %1898 = vmatprep.mubr.bf16.mxu0 %v1161
        %1899 = vmatmul.mubr.bf16.gmra.mrb[0].mxu0 %v1160
        %v1900 = vpop.f32.mrb[0].mxu0
        %v1901 = vadd.f32 %v1848, %v1900
        %v1902 = vpop.f32.mrb[0].mxu0
        %v1903 = vadd.f32 %v1850, %v1902
        %v1904 = vpop.f32.mrb[0].mxu0
        %v1905 = vadd.f32 %v1852, %v1904
        %v1906 = vpop.f32.mrb[0].mxu0
        %v1907 = vadd.f32 %v1854, %v1906
        %1908 = vdwg.mxu0
        %v1909 = vrot.slane %v1891, 4
        %v1910 = vadd.f32 %v1891, %v1909
        %v1911 = vrot.slane %v1910, 2
        %v1912 = vadd.f32 %v1910, %v1911
        %v1913 = vrot.slane %v1912, 1
        %v1914 = vadd.f32 %v1912, %v1913
        %v1915 = vrot.slane %v1893, 4
        %v1916 = vadd.f32 %v1893, %v1915
        %v1917 = vrot.slane %v1916, 2
        %v1918 = vadd.f32 %v1916, %v1917
        %v1919 = vrot.slane %v1918, 1
        %v1920 = vadd.f32 %v1918, %v1919
        %v1921 = vrot.slane %v1895, 4
        %v1922 = vadd.f32 %v1895, %v1921
        %v1923 = vrot.slane %v1922, 2
        %v1924 = vadd.f32 %v1922, %v1923
        %v1925 = vrot.slane %v1924, 1
        %v1926 = vadd.f32 %v1924, %v1925
        %v1927 = vrot.slane %v1897, 4
        %v1928 = vadd.f32 %v1897, %v1927
        %v1929 = vrot.slane %v1928, 2
        %v1930 = vadd.f32 %v1928, %v1929
        %v1931 = vrot.slane %v1930, 1
        %v1932 = vadd.f32 %v1930, %v1931
        %v1933 = vrot.slane %v1901, 4
        %v1934 = vadd.f32 %v1901, %v1933
        %v1935 = vrot.slane %v1934, 2
        %v1936 = vadd.f32 %v1934, %v1935
        %v1937 = vrot.slane %v1936, 1
        %v1938 = vadd.f32 %v1936, %v1937
        %v1939 = vrot.slane %v1903, 4
        %v1940 = vadd.f32 %v1903, %v1939
        %v1941 = vrot.slane %v1940, 2
        %v1942 = vadd.f32 %v1940, %v1941
        %v1943 = vrot.slane %v1942, 1
        %v1944 = vadd.f32 %v1942, %v1943
        %v1945 = vrot.slane %v1905, 4
        %v1946 = vadd.f32 %v1905, %v1945
        %v1947 = vrot.slane %v1946, 2
        %v1948 = vadd.f32 %v1946, %v1947
        %v1949 = vrot.slane %v1948, 1
        %v1950 = vadd.f32 %v1948, %v1949
        %v1951 = vrot.slane %v1907, 4
        %v1952 = vadd.f32 %v1907, %v1951
        %v1953 = vrot.slane %v1952, 2
        %v1954 = vadd.f32 %v1952, %v1953
        %v1955 = vrot.slane %v1954, 1
        %v1956 = vadd.f32 %v1954, %v1955
        %1961 = vrot.lane.b32.xlu0 %v1914, 96
        %v1962 = vpop.permute.xlu0 %1961
        %1963 = vrot.lane.b32.xlu0 %v1926, 96
        %v1964 = vpop.permute.xlu0 %1963
        %1965 = vrot.lane.b32.xlu0 %v1938, 96
        %v1966 = vpop.permute.xlu0 %1965
        %1967 = vrot.lane.b32.xlu0 %v1950, 96
        %v1968 = vpop.permute.xlu0 %1967
        %v1973 = vadd.f32 %v1914, %v1962
        %v1974 = vadd.f32 %v1926, %v1964
        %v1975 = vadd.f32 %v1938, %v1966
        %v1976 = vadd.f32 %v1950, %v1968
        %1977 = vrot.lane.b32.xlu0 %v1914, 64
        %v1978 = vpop.permute.xlu0 %1977
        %1979 = vrot.lane.b32.xlu0 %v1926, 64
        %v1980 = vpop.permute.xlu0 %1979
        %1981 = vrot.lane.b32.xlu0 %v1938, 64
        %v1982 = vpop.permute.xlu0 %1981
        %1983 = vrot.lane.b32.xlu0 %v1950, 64
        %v1984 = vpop.permute.xlu0 %1983
        %v1989 = vadd.f32 %v1973, %v1978
        %v1990 = vadd.f32 %v1974, %v1980
        %v1991 = vadd.f32 %v1975, %v1982
        %v1992 = vadd.f32 %v1976, %v1984
        %1993 = vrot.lane.b32.xlu0 %v1914, 32
        %v1994 = vpop.permute.xlu0 %1993
        %1995 = vrot.lane.b32.xlu0 %v1926, 32
        %v1996 = vpop.permute.xlu0 %1995
        %1997 = vrot.lane.b32.xlu0 %v1938, 32
        %v1998 = vpop.permute.xlu0 %1997
        %1999 = vrot.lane.b32.xlu0 %v1950, 32
        %v2000 = vpop.permute.xlu0 %1999
        %v2005 = vadd.f32 %v1989, %v1994
        %v2006 = vadd.f32 %v1990, %v1996
        %v2007 = vadd.f32 %v1991, %v1998
        %v2008 = vadd.f32 %v1992, %v2000
        %v2009 = vadd.f32 %v2005, %v1920
        %v2010 = vadd.f32 %v2006, %v1932
        %v2011 = vadd.f32 %v2007, %v1944
        %v2012 = vadd.f32 %v2008, %v1956
        %2017 = vrot.lane.b32.xlu0 %v1920, 96
        %v2018 = vpop.permute.xlu0 %2017
        %2019 = vrot.lane.b32.xlu0 %v1932, 96
        %v2020 = vpop.permute.xlu0 %2019
        %2021 = vrot.lane.b32.xlu0 %v1944, 96
        %v2022 = vpop.permute.xlu0 %2021
        %2023 = vrot.lane.b32.xlu0 %v1956, 96
        %v2024 = vpop.permute.xlu0 %2023
        %v2029 = vadd.f32 %v2009, %v2018
        %v2030 = vadd.f32 %v2010, %v2020
        %v2031 = vadd.f32 %v2011, %v2022
        %v2032 = vadd.f32 %v2012, %v2024
        %2033 = vrot.lane.b32.xlu0 %v1920, 64
        %v2034 = vpop.permute.xlu0 %2033
        %2035 = vrot.lane.b32.xlu0 %v1932, 64
        %v2036 = vpop.permute.xlu0 %2035
        %2037 = vrot.lane.b32.xlu0 %v1944, 64
        %v2038 = vpop.permute.xlu0 %2037
        %2039 = vrot.lane.b32.xlu0 %v1956, 64
        %v2040 = vpop.permute.xlu0 %2039
        %v2045 = vadd.f32 %v2029, %v2034
        %v2046 = vadd.f32 %v2030, %v2036
        %v2047 = vadd.f32 %v2031, %v2038
        %v2048 = vadd.f32 %v2032, %v2040
        %2049 = vrot.lane.b32.xlu0 %v1920, 32
        %v2050 = vpop.permute.xlu0 %2049
        %2051 = vrot.lane.b32.xlu0 %v1932, 32
        %v2052 = vpop.permute.xlu0 %2051
        %2053 = vrot.lane.b32.xlu0 %v1944, 32
        %v2054 = vpop.permute.xlu0 %2053
        %2055 = vrot.lane.b32.xlu0 %v1956, 32
        %v2056 = vpop.permute.xlu0 %2055
        %v2061 = vadd.f32 %v2045, %v2050
        %v2062 = vadd.f32 %v2046, %v2052
        %v2063 = vadd.f32 %v2047, %v2054
        %v2064 = vadd.f32 %v2048, %v2056
        %v2065 = vmul.f32 %v2061, 0.015625
        %v2066 = vmul.f32 %v2062, 0.015625
        %v2067 = vmul.f32 %v2063, 0.015625
        %v2068 = vmul.f32 %v2064, 0.015625
        %v2069 = vld [vmem:[#allocation19] sm:$0x1]
        %v2070 = vld [vmem:[#allocation14] sm:$0x1]
        %v2071 = vlaneseq
        %v2072 = vshrl.u32 %v2071, 7
        %v2073 = vsub.s32 0, %v2072
        %v2074 = vrot.slane %v2070, %v2073
        %v2075 = vmul.f32 %v2065, %v2074
        %v2076 = vmul.f32 %v2066, %v2074
        %v2077 = vmul.f32 %v2067, %v2074
        %v2078 = vmul.f32 %v2068, %v2074
        %v2083 = vrot.slane %v2076, 7
        %vm2084 = vcmask 1041409
        %v2085 = vsel %vm2084, %v2083, %v2075
        %v2086 = vrot.slane %v2077, 6
        %vm2087 = vcmask 1042434
        %v2088 = vsel %vm2087, %v2086, %v2085
        %v2089 = vrot.slane %v2078, 5
        %vm2090 = vcmask 1043459
        %v2091 = vsel %vm2090, %v2089, %v2088
        %vm2093 = vcmask 257024
        %v2094 = vsel %vm2093, %v2091, 0.0
        %2095 = vadd.xlane.f32.xlu0 %v2094
        %v2096 = vpop.xlane.xlu0 %2095
        %v2097 = vld [vmem:[#allocation16] sm:$0x1]
        %v2099 = vlaneseq
        %v2100 = vshrl.u32 %v2099, 7
        %v2101 = vsub.s32 0, %v2100
        %v2102 = vrot.slane %v2097, %v2101
        %v2104 = vadd.f32 %v2096, %v2102
        %v2105 = vmax.f32 %v2104, 0.0
        %v2106 = vld [vmem:[#allocation17] sm:$0x1]
        %2108 = vset.pattern.permute.xlu0 0
        %2109 = vperm.xlu0 %2108, %v2105
        %v2110 = vpop.permute.xlu0 %2109
        %v2112 = vlaneseq
        %v2113 = vshrl.u32 %v2112, 7
        %v2114 = vsub.s32 0, %v2113
        %v2115 = vrot.slane %v2106, %v2114
        %v2116 = vmul.f32 %v2110, %v2115
        %v2118 = vlaneseq
        %v2119 = vshrl.u32 %v2118, 7
        %v2120 = vsub.s32 0, %v2119
        %v2121 = vrot.slane %v2069, %v2120
        %v2123 = vadd.f32 %v2121, %v2116
        %v2124 = vld [vmem:[#allocation14 + $0x1] sm:$0x1]
        %v2125 = vlaneseq
        %v2126 = vshrl.u32 %v2125, 7
        %v2127 = vsub.s32 0, %v2126
        %v2128 = vrot.slane %v2124, %v2127
        %v2129 = vmul.f32 %v2065, %v2128
        %v2130 = vmul.f32 %v2066, %v2128
        %v2131 = vmul.f32 %v2067, %v2128
        %v2132 = vmul.f32 %v2068, %v2128
        %v2137 = vrot.slane %v2130, 7
        %v2138 = vsel %vm2084, %v2137, %v2129
        %v2139 = vrot.slane %v2131, 6
        %v2140 = vsel %vm2087, %v2139, %v2138
        %v2141 = vrot.slane %v2132, 5
        %v2142 = vsel %vm2090, %v2141, %v2140
        %v2144 = vsel %vm2093, %v2142, 0.0
        %2145 = vadd.xlane.f32.xlu0 %v2144
        %v2146 = vpop.xlane.xlu0 %2145
        %v2147 = vadd.f32 %v2146, %v2102
        %v2148 = vmax.f32 %v2147, 0.0
        %v2149 = vld [vmem:[#allocation17 + $0x1] sm:$0x1]
        %2151 = vset.pattern.permute.xlu0 1
        %2152 = vperm.xlu0 %2151, %v2148
        %v2153 = vpop.permute.xlu0 %2152
        %v2155 = vlaneseq
        %v2156 = vshrl.u32 %v2155, 7
        %v2157 = vsub.s32 0, %v2156
        %v2158 = vrot.slane %v2149, %v2157
        %v2159 = vmul.f32 %v2153, %v2158
        %v2160 = vadd.f32 %v2123, %v2159
        %v2161 = vxor.u32 %v2160, 2147483648
        %v2162 = vmul.f32 %v2161, 1.442695
        %v2163 = vpow.pop %v2162
        %v2164 = vadd.f32 %v2163, 1.0
        %v2165 = vrcp.pop %v2164
        %v2166 = vmul.f32 1.0, %v2165
        %2168 = vrot.lane.b32.xlu0 %v2166, 32
        %v2169 = vpop.permute.xlu0 %2168
        %2171 = vrot.lane.b32.xlu0 %v2166, 64
        %v2172 = vpop.permute.xlu0 %2171
        %2174 = vrot.lane.b32.xlu0 %v2166, 96
        %v2175 = vpop.permute.xlu0 %2174
        %vm2177 = vcmask 261120
        %v2178 = vsel %vm2177, %v2166, %v2169
        %vm2179 = vcmask 523264
        %v2180 = vsel %vm2179, %v2178, %v2172
        %vm2181 = vcmask 785408
        %v2182 = vsel %vm2181, %v2180, %v2175
        %v2183 = vld [vmem:[#allocation11] sm:$0xff]
        %v2184 = vld [vmem:[#allocation11 + $0x8] sm:$0xff]
        %v2185 = vld [vmem:[#allocation11 + $0x10] sm:$0xff]
        %v2186 = vld [vmem:[#allocation11 + $0x18] sm:$0xff]
        %v2187 = vld [vmem:[#allocation11 + $0x20] sm:$0xff]
        %v2188 = vld [vmem:[#allocation11 + $0x28] sm:$0xff]
        %v2189 = vld [vmem:[#allocation11 + $0x30] sm:$0xff]
        %v2190 = vld [vmem:[#allocation11 + $0x38] sm:$0xff]
        %v2191 = vld [vmem:[#allocation11 + $0x40] sm:$0xff]
        %v2192 = vld [vmem:[#allocation11 + $0x48] sm:$0xff]
        %v2193 = vld [vmem:[#allocation11 + $0x50] sm:$0xff]
        %v2194 = vld [vmem:[#allocation11 + $0x58] sm:$0xff]
        %v2195 = vld [vmem:[#allocation11 + $0x60] sm:$0xff]
        %v2196 = vld [vmem:[#allocation11 + $0x68] sm:$0xff]
        %v2197 = vld [vmem:[#allocation11 + $0x70] sm:$0xff]
        %v2198 = vld [vmem:[#allocation11 + $0x78] sm:$0xff]
        %v2199 = vld [vmem:[#allocation13] sm:$0x3]
        %v2201 = vlaneseq
        %v2202 = vshrl.u32 %v2201, 7
        %v2203 = vsub.s32 0, %v2202
        %v2204 = vrot.slane %v2199, %v2203
        %v2205 = vlaneseq
        %v2206 = vshrl.u32 %v2205, 7
        %v2207 = vsub.s32 1, %v2206
        %v2208 = vrot.slane %v2199, %v2207
        %v2227 = vunpack.c.l.b16 %v2183
        %v2228 = vunpack.c.h.b16 %v2183
        %v2229 = vunpack.c.l.b16 %v2184
        %v2230 = vunpack.c.h.b16 %v2184
        %v2231 = vunpack.c.l.b16 %v2185
        %v2232 = vunpack.c.h.b16 %v2185
        %v2233 = vunpack.c.l.b16 %v2186
        %v2234 = vunpack.c.h.b16 %v2186
        %v2235 = vunpack.c.l.b16 %v2187
        %v2236 = vunpack.c.h.b16 %v2187
        %v2237 = vunpack.c.l.b16 %v2188
        %v2238 = vunpack.c.h.b16 %v2188
        %v2239 = vunpack.c.l.b16 %v2189
        %v2240 = vunpack.c.h.b16 %v2189
        %v2241 = vunpack.c.l.b16 %v2190
        %v2242 = vunpack.c.h.b16 %v2190
        %v2243 = vunpack.c.l.b16 %v2191
        %v2244 = vunpack.c.h.b16 %v2191
        %v2245 = vunpack.c.l.b16 %v2192
        %v2246 = vunpack.c.h.b16 %v2192
        %v2247 = vunpack.c.l.b16 %v2193
        %v2248 = vunpack.c.h.b16 %v2193
        %v2249 = vunpack.c.l.b16 %v2194
        %v2250 = vunpack.c.h.b16 %v2194
        %v2251 = vunpack.c.l.b16 %v2195
        %v2252 = vunpack.c.h.b16 %v2195
        %v2253 = vunpack.c.l.b16 %v2196
        %v2254 = vunpack.c.h.b16 %v2196
        %v2255 = vunpack.c.l.b16 %v2197
        %v2256 = vunpack.c.h.b16 %v2197
        %v2257 = vunpack.c.l.b16 %v2198
        %v2258 = vunpack.c.h.b16 %v2198
        %v2259 = vpack.c.b16 %v2229, %v2227
        %v2260 = vpack.c.b16 %v2230, %v2228
        %v2261 = vpack.c.b16 %v2233, %v2231
        %v2262 = vpack.c.b16 %v2234, %v2232
        %v2263 = vpack.c.b16 %v2237, %v2235
        %v2264 = vpack.c.b16 %v2238, %v2236
        %v2265 = vpack.c.b16 %v2241, %v2239
        %v2266 = vpack.c.b16 %v2242, %v2240
        %v2267 = vpack.c.b16 %v2245, %v2243
        %v2268 = vpack.c.b16 %v2246, %v2244
        %v2269 = vpack.c.b16 %v2249, %v2247
        %v2270 = vpack.c.b16 %v2250, %v2248
        %v2271 = vpack.c.b16 %v2253, %v2251
        %v2272 = vpack.c.b16 %v2254, %v2252
        %v2273 = vpack.c.b16 %v2257, %v2255
        %v2274 = vpack.c.b16 %v2258, %v2256
        %2291 = vmatprep.subr.bf16.mxu0 %v2260
        %2292 = vmatpush1.bf16.msra.mxu0 %v2259
        %2293 = vmatprep.subr.bf16.mxu0 %v2262
        %2294 = vmatpush1.bf16.msra.mxu0 %v2261
        %2295 = vmatprep.subr.bf16.mxu0 %v2264
        %2296 = vmatpush1.bf16.msra.mxu0 %v2263
        %2297 = vmatprep.subr.bf16.mxu0 %v2266
        %2298 = vmatpush1.bf16.msra.mxu0 %v2265
        %2299 = vmatprep.subr.bf16.mxu0 %v2268
        %2300 = vmatpush1.bf16.msra.mxu0 %v2267
        %2301 = vmatprep.subr.bf16.mxu0 %v2270
        %2302 = vmatpush1.bf16.msra.mxu0 %v2269
        %2303 = vmatprep.subr.bf16.mxu0 %v2272
        %2304 = vmatpush1.bf16.msra.mxu0 %v2271
        %2305 = vmatprep.subr.bf16.mxu0 %v2274
        %2306 = vmatpush1.bf16.msra.mxu0 %v2273
        %2307 = vmatprep.subr.bf16.mxu0 0
        %2308 = vmatpush1.bf16.msra.mxu0 0
        %2309 = vmatprep.subr.bf16.mxu0 0
        %2310 = vmatpush1.bf16.msra.mxu0 0
        %2311 = vmatprep.subr.bf16.mxu0 0
        %2312 = vmatpush1.bf16.msra.mxu0 0
        %2313 = vmatprep.subr.bf16.mxu0 0
        %2314 = vmatpush1.bf16.msra.mxu0 0
        %2315 = vmatprep.subr.bf16.mxu0 0
        %2316 = vmatpush1.bf16.msra.mxu0 0
        %2317 = vmatprep.subr.bf16.mxu0 0
        %2318 = vmatpush1.bf16.msra.mxu0 0
        %2319 = vmatprep.subr.bf16.mxu0 0
        %2320 = vmatpush1.bf16.msra.mxu0 0
        %2321 = vmatprep.subr.bf16.mxu0 0
        %2322 = vmatpush1.bf16.msra.mxu0 0
        %2323 = vmatprep.mubr.bf16.mxu0 0
        %2324 = vmatmul.mubr.bf16.gmra.mrb[0].mxu0 %v659
        %v2325 = vpop.f32.mrb[0].mxu0
        %v2326 = vadd.f32 %v2204, %v2325
        %v2327 = vpop.f32.mrb[0].mxu0
        %v2328 = vadd.f32 %v2208, %v2327
        %v2329 = vpop.f32.mrb[0].mxu0
        %v2330 = vadd.f32 %v2204, %v2329
        %v2331 = vpop.f32.mrb[0].mxu0
        %v2332 = vadd.f32 %v2208, %v2331
        %2333 = vmatprep.mubr.bf16.mxu0 0
        %2334 = vmatmul.mubr.bf16.gmra.mrb[0].mxu0 %v662
        %v2335 = vpop.f32.mrb[0].mxu0
        %v2336 = vadd.f32 %v2204, %v2335
        %v2337 = vpop.f32.mrb[0].mxu0
        %v2338 = vadd.f32 %v2208, %v2337
        %v2339 = vpop.f32.mrb[0].mxu0
        %v2340 = vadd.f32 %v2204, %v2339
        %v2341 = vpop.f32.mrb[0].mxu0
        %v2342 = vadd.f32 %v2208, %v2341
        %2343 = vdwg.mxu0
        %v2345 = vcombine.low %v2182, %v2182
        %v2347 = vunpack.c.l.s4 1966171168
        %v2348 = vunpack.c.0.s8 %v2347
        %v2349 = vlaneseq
        %v2350 = vshrl.u32 %v2349, 7
        %v2351 = vsub.s32 %v2348, %v2350
        %v2352 = vrot.slane %v2345, %v2351
        %v2353 = vcombine.high %v2352, %v2352
        %v2355 = vunpack.c.l.s4 1966171168
        %v2356 = vunpack.c.0.s8 %v2355
        %v2357 = vlaneseq
        %v2358 = vshrl.u32 %v2357, 7
        %v2359 = vsub.s32 %v2356, %v2358
        %v2360 = vrot.slane %v2352, %v2359
        %v2362 = vunpack.c.l.s4 1966171168
        %v2363 = vunpack.c.0.s8 %v2362
        %v2364 = vlaneseq
        %v2365 = vshrl.u32 %v2364, 7
        %v2366 = vsub.s32 %v2363, %v2365
        %v2367 = vrot.slane %v2353, %v2366
        %v2368 = vcombine.high %v2360, %v2360
        %v2369 = vcombine.high %v2367, %v2367
        %v2370 = vlaneseq
        %v2371 = vshrl.u32 %v2370, 7
        %v2372 = vsub.s32 0, %v2371
        %v2373 = vrot.slane %v2360, %v2372
        %v2374 = vlaneseq
        %v2375 = vshrl.u32 %v2374, 7
        %v2376 = vsub.s32 1, %v2375
        %v2377 = vrot.slane %v2360, %v2376
        %v2378 = vlaneseq
        %v2379 = vshrl.u32 %v2378, 7
        %v2380 = vsub.s32 0, %v2379
        %v2381 = vrot.slane %v2367, %v2380
        %v2382 = vlaneseq
        %v2383 = vshrl.u32 %v2382, 7
        %v2384 = vsub.s32 1, %v2383
        %v2385 = vrot.slane %v2367, %v2384
        %v2386 = vlaneseq
        %v2387 = vshrl.u32 %v2386, 7
        %v2388 = vsub.s32 0, %v2387
        %v2389 = vrot.slane %v2368, %v2388
        %v2390 = vlaneseq
        %v2391 = vshrl.u32 %v2390, 7
        %v2392 = vsub.s32 1, %v2391
        %v2393 = vrot.slane %v2368, %v2392
        %v2394 = vlaneseq
        %v2395 = vshrl.u32 %v2394, 7
        %v2396 = vsub.s32 0, %v2395
        %v2397 = vrot.slane %v2369, %v2396
        %v2398 = vlaneseq
        %v2399 = vshrl.u32 %v2398, 7
        %v2400 = vsub.s32 1, %v2399
        %v2401 = vrot.slane %v2369, %v2400
        %v2410 = vmul.f32 %v1891, %v2373
        %v2411 = vmul.f32 %v1893, %v2377
        %v2412 = vmul.f32 %v1895, %v2381
        %v2413 = vmul.f32 %v1897, %v2385
        %v2414 = vmul.f32 %v1901, %v2389
        %v2415 = vmul.f32 %v1903, %v2393
        %v2416 = vmul.f32 %v1905, %v2397
        %v2417 = vmul.f32 %v1907, %v2401
        %v2418 = vadd.f32 %v2410, %v2326
        %v2419 = vadd.f32 %v2411, %v2328
        %v2420 = vadd.f32 %v2412, %v2330
        %v2421 = vadd.f32 %v2413, %v2332
        %v2422 = vadd.f32 %v2414, %v2336
        %v2423 = vadd.f32 %v2415, %v2338
        %v2424 = vadd.f32 %v2416, %v2340
        %v2425 = vadd.f32 %v2417, %v2342
        %v2426 = vmax.f32 %v2418, 0.0
        %v2427 = vmax.f32 %v2419, 0.0
        %v2428 = vmax.f32 %v2420, 0.0
        %v2429 = vmax.f32 %v2421, 0.0
        %v2430 = vmax.f32 %v2422, 0.0
        %v2431 = vmax.f32 %v2423, 0.0
        %v2432 = vmax.f32 %v2424, 0.0
        %v2433 = vmax.f32 %v2425, 0.0
        %2434 = vst [vmem:[%s535] sm:$0xff] %v2426
        %2435 = vst [vmem:[%s535 + $0x8] sm:$0xff] %v2427
        %2436 = vst [vmem:[%s535 + $0x10] sm:$0xff] %v2428
        %2437 = vst [vmem:[%s535 + $0x18] sm:$0xff] %v2429
        %2438 = vst [vmem:[%s535 + $0x20] sm:$0xff] %v2430
        %2439 = vst [vmem:[%s535 + $0x28] sm:$0xff] %v2431
        %2440 = vst [vmem:[%s535 + $0x30] sm:$0xff] %v2432
        %2441 = vst [vmem:[%s535 + $0x38] sm:$0xff] %v2433
        %s2442 = sand.u32 %s277, 1
        %s2443 = scalar_lea.sflag [#allocation4], %s2442
        %s2444 = sand.u32 %s277, 1
        %s2445 = smul.addr %s2444, 64
        %s2446 = scalar_lea.vmem [#allocation20], %s2445
        // Predicated region
        $region109: #{cifar_se_basic_block_nhwc.1} parent=63 // pred_check
          %p2447 = pneg %p287
        $region110: #{cifar_se_basic_block_nhwc.1} parent=63 // pred_check_branch
          %2449 = sbr.rel (%p2447) target = $region112
        $region111: #{cifar_se_basic_block_nhwc.1} parent=63 // pred_region
          %s2450 = smul.u32 4, %s33
          %s2452 = ssub.s32 1024, 1024
          %2453 = vsyncadd %s2443, %s2452
          %s2454 = smul.addr %s2450, 2
          %s2455 = smul.addr %s2454, 128
          %s2456 = scalar_lea.hbm %s11, %s2455
          %s2457 = sshll.u32 %s2446, 4
          %s2458 = int_to_ptr.vmem [resolvable:$true] %s2457
          %2463 = dma.vmem_to_hbm [thread:$0]  %s2458, 1024, %s2456, %s2443, 256, 256, 16
        $region112: #{cifar_se_basic_block_nhwc.1} parent=63 // pred_fallthru
          _
      $region64: #{cifar_se_basic_block_nhwc.1} parent=5 // pred_fallthru
        _
      %p2464 = scmp.le.s32.totalorder 2, %s28
      // Predicated region
      $region113: #{cifar_se_basic_block_nhwc.1} parent=5 // pred_check
        %p2465 = pneg %p2464
      $region114: #{cifar_se_basic_block_nhwc.1} parent=5 // pred_check_branch
        %2467 = sbr.rel (%p2465) target = $region116
      $region115: #{cifar_se_basic_block_nhwc.1} parent=5 // pred_region
        %s2468 = ssub.s32 %s28, 2
        // Predicated region
        $region117: #{cifar_se_basic_block_nhwc.1} parent=115 // pred_check
          %p2469 = pneg %p293
        $region118: #{cifar_se_basic_block_nhwc.1} parent=115 // pred_check_branch
          %2471 = sbr.rel (%p2469) target = $region120
        $region119: #{cifar_se_basic_block_nhwc.1} parent=115 // pred_region
          %s2472 = sand.u32 %s278, 1
          %s2473 = scalar_lea.sflag [#allocation4], %s2472
          %s2474 = sand.u32 %s278, 1
          %s2475 = smul.addr %s2474, 64
          %s2476 = scalar_lea.vmem [#allocation20], %s2475
          %2477 = dma.done %s2473, 1024
        $region120: #{cifar_se_basic_block_nhwc.1} parent=115 // pred_fallthru
          _
      $region116: #{cifar_se_basic_block_nhwc.1} parent=5 // pred_fallthru
        _
    $region6: #{cifar_se_basic_block_nhwc.1} parent=1 // loop_footer
      %s32 = sadd.s32 1, %s28
    $region7: #{cifar_se_basic_block_nhwc.1} parent=1 // loop_footer_branch
      %27 = sbr.rel target = $region3
    $region8: #{cifar_se_basic_block_nhwc.1} parent=1 // loop_exit
      _
    %2478 = vsyncpa [#allocation3], 1
    %s2479 = scalar_lea.sflag [#allocation3], 1
    %2480 = vsyncpa %s2479, 1
    %2481 = vsyncpa [#allocation6], 1
    %2482 = vsyncpa [#allocation9], 1
    %2483 = vsyncpa [#allocation12], 1
    %2484 = vsyncpa [#allocation15], 1
    %2485 = vsyncpa [#allocation18], 1
    %2486 = vsyncpa [#allocation4], 1
    %s2487 = scalar_lea.sflag [#allocation4], 1
    %2488 = vsyncpa %s2487, 1

</llo_original>
